<compile_context>
chip_gen: v7x
topology: tpu7x:2x2x1
jax: 0.10.0
libtpu: 0.0.40
codegen_flags: <defaults>
</compile_context>

<pallas_src>
import functools

import jax
import jax.numpy as jnp
from jax.experimental import pallas as pl
from jax.experimental.pallas import tpu as pltpu


# ----------------------------------------------------------------------------
# Fused StConvBlock kernel factory.  All sizes are static Python ints (closure),
# so there is no traced-bool control flow anywhere.
# ----------------------------------------------------------------------------
def _make_stconv_kernel(*, B, T, N, c_si, c_t, c_oo, ks, kt, dil, p_drop, eps):
    T2 = T - dil * (kt - 1)          # after temporal conv 1
    T3 = T2 - dil * (kt - 1)         # after temporal conv 2
    L1, L2 = T2 * N, T3 * N
    inv_keep = 1.0 / (1.0 - p_drop) if p_drop < 1.0 else 0.0

    def tconv(x2d, w, b, t_in):
        """Temporal conv as one im2col matmul.
        x2d: [c_in, t_in*N]; w: [c_out, kt*c_in] (col index = k*c_in + ci); b: [c_out, 1]."""
        t_out = t_in - dil * (kt - 1)
        L = t_out * N
        xcat = jnp.concatenate(
            [x2d[:, k * dil * N: k * dil * N + L] for k in range(kt)], axis=0)
        return jnp.dot(w, xcat, preferred_element_type=jnp.float32) + b

    def add_residual(acc, res, c_in_, c_out_):
        """acc: [c_out_, L]; res: [c_in_, L] (time-sliced input)."""
        if c_in_ == c_out_:
            return acc + res
        elif c_in_ < c_out_:
            resp = jnp.concatenate(
                [res, jnp.zeros((c_out_ - c_in_, res.shape[-1]), jnp.float32)], axis=0)
            return acc + resp
        else:
            # TODO(synk): 1x1 'modify' conv residual path (c_in > c_out) not used by StConvBlock.
            raise NotImplementedError("c_in > c_out residual path not implemented")

    def kern(x_ref, w1_ref, b1_ref, th_ref, tb_ref, bk_ref,
             w2_ref, b2_ref, gam_ref, bet_ref, u_ref, o_ref):
        h3_slabs = []
        for b in range(B):  # static unroll over the (tiny) batch; each iter is lane-dense MXU work
            xb = x_ref[b]                                      # [c_si, T*N]

            # ---- TemporalConvLayer(kt, c_si, c_t, 'GLU') ----
            conv = tconv(xb, w1_ref[...], b1_ref[...], T)      # [2*c_t, L1]  (P rows then G rows)
            p_gate = conv[:c_t]
            g_gate = conv[c_t:]
            res = xb[:, dil * (kt - 1) * N:]                   # [c_si, L1]
            p_gate = add_residual(p_gate, res, c_si, c_t)
            h1 = p_gate * jax.nn.sigmoid(g_gate)               # [c_t, L1]

            # ---- SpatioConvLayer(ks, c_t, c_t) : gconv + residual + ReLU ----
            # gc = sum_s theta_s @ h1 @ kron(I_T2, K_s)   (exactly the reference GConv math)
            gc = jnp.zeros((c_t, L1), jnp.float32)
            for s in range(ks):
                a_s = jnp.dot(th_ref[s], h1, preferred_element_type=jnp.float32)   # [c_t, L1]
                gc = gc + jnp.dot(a_s, bk_ref[s], preferred_element_type=jnp.float32)
            h2 = jnp.maximum(gc + tb_ref[...] + h1, 0.0)       # [c_t, L1]

            # ---- TemporalConvLayer(kt, c_t, c_oo, 'relu') ----
            conv2 = tconv(h2, w2_ref[...], b2_ref[...], T2)    # [c_oo, L2]
            res2 = h2[:, dil * (kt - 1) * N:]                  # [c_t, L2]
            conv2 = add_residual(conv2, res2, c_t, c_oo)
            h3_slabs.append(jnp.maximum(conv2, 0.0))           # [c_oo, L2]

        # Lane-concat the batch: per-channel rows, B*L2 lanes (lane-dense everywhere).
        h3 = jnp.concatenate(h3_slabs, axis=-1)                # [c_oo, B*L2]

        # ---- BatchNorm2d(c_oo) with training-mode (biased) batch statistics ----
        mean = jnp.mean(h3, axis=-1, keepdims=True)            # [c_oo, 1]
        var = jnp.mean(h3 * h3, axis=-1, keepdims=True) - mean * mean
        y = (h3 - mean) * jax.lax.rsqrt(var + eps) * gam_ref[...] + bet_ref[...]

        # ---- dropout: F.dropout(x, keep_prob) uses keep_prob as the DROP prob (ref semantics) ----
        if p_drop > 0.0:
            keep = u_ref[...] >= p_drop                        # uniform [0,1) mask from wrapper
            y = jnp.where(keep, y * inv_keep, 0.0)

        for b in range(B):
            o_ref[b] = y[:, b * L2:(b + 1) * L2]

    return kern


# ----------------------------------------------------------------------------
# Full StConvBlock forward (NCHW in / NCHW out).  `seed` is a traced scalar.
# ----------------------------------------------------------------------------
@functools.partial(jax.jit,
                   static_argnames=("ks", "kt", "dilation", "keep_prob", "bn_eps"))
def st_conv_block(x_nchw, params, seed, *, ks, kt, dilation, keep_prob, bn_eps=1e-5):
    B, c_si, T, N = x_nchw.shape
    c_t = params["w1"].shape[0] // 2
    c_oo = params["w2"].shape[0]
    T2 = T - dilation * (kt - 1)
    T3 = T2 - dilation * (kt - 1)
    L1, L2 = T2 * N, T3 * N

    # Flattened NCHW == channels-on-sublane / (T*N)-on-lane. No transposes needed.
    x_flat = x_nchw.reshape(B, c_si, T * N).astype(jnp.float32)

    # Block-diagonal graph kernels: kron(I_T2, K_s), K_s = graph_kernel[:, s*N:(s+1)*N].
    gk = params["graph_kernel"].astype(jnp.float32)
    eye_t2 = jnp.eye(T2, dtype=jnp.float32)
    bk = jnp.stack([jnp.kron(eye_t2, gk[:, s * N:(s + 1) * N]) for s in range(ks)], axis=0)

    # Dropout uniforms generated outside the kernel (traced seed -> no recompiles).
    # TODO(synk): could use the on-chip pltpu.prng_* PRNG instead to avoid this tiny HBM pass.
    key = jax.random.PRNGKey(seed)
    u = jax.random.uniform(key, (c_oo, B * L2), jnp.float32)

    kern = _make_stconv_kernel(
        B=B, T=T, N=N, c_si=c_si, c_t=c_t, c_oo=c_oo,
        ks=ks, kt=kt, dil=dilation,
        p_drop=float(keep_prob), eps=float(bn_eps))

    in_specs = [
        pl.BlockSpec((B, c_si, T * N), lambda i: (0, 0, 0)),    # x
        pl.BlockSpec((2 * c_t, kt * c_si), lambda i: (0, 0)),   # w1 (GLU P+G folded)
        pl.BlockSpec((2 * c_t, 1), lambda i: (0, 0)),           # b1
        pl.BlockSpec((ks, c_t, c_t), lambda i: (0, 0, 0)),      # theta (per graph hop)
        pl.BlockSpec((c_t, 1), lambda i: (0, 0)),               # theta bias
        pl.BlockSpec((ks, L1, L1), lambda i: (0, 0, 0)),        # block-diag graph kernels
        pl.BlockSpec((c_oo, kt * c_t), lambda i: (0, 0)),       # w2
        pl.BlockSpec((c_oo, 1), lambda i: (0, 0)),              # b2
        pl.BlockSpec((c_oo, 1), lambda i: (0, 0)),              # BN gamma
        pl.BlockSpec((c_oo, 1), lambda i: (0, 0)),              # BN beta
        pl.BlockSpec((c_oo, B * L2), lambda i: (0, 0)),         # dropout uniforms
    ]
    out_specs = pl.BlockSpec((B, c_oo, L2), lambda i: (0, 0, 0))

    out = pl.pallas_call(
        kern,
        out_shape=jax.ShapeDtypeStruct((B, c_oo, L2), jnp.float32),
        grid=(1,),
        in_specs=in_specs,
        out_specs=out_specs,
        compiler_params=pltpu.CompilerParams(dimension_semantics=("arbitrary",)),
    )(x_flat, params["w1"], params["b1"], params["theta"], params["theta_b"],
      bk, params["w2"], params["b2"], params["gamma"], params["beta"], u)

    return out.reshape(B, c_oo, T3, N)   # NCHW [B, c_oo, T'', N]


# ----------------------------------------------------------------------------
# Deterministic synthetic parameters, created directly in the kernel layout.
# Mapping to the PyTorch parameters:
#   glu Conv2d(c_si, 2*c_t, (kt,1)) weight W[co, ci, k, 0]  -> w1[co, k*c_si + ci]
#   conv2d(c_t, c_oo, (kt,1))      weight W[co, ci, k, 0]  -> w2[co, k*c_t + ci]
#   theta = Linear(ks*c_t, c_t)    weight W[co, ci*ks + s] -> theta[s, co, ci]
# ----------------------------------------------------------------------------
def init_params(key, *, ks, kt, c_si, c_t, c_oo, n_route):
    k = jax.random.split(key, 6)
    s = 0.1
    return {
        "w1": s * jax.random.normal(k[0], (2 * c_t, kt * c_si), jnp.float32),
        "b1": s * jax.random.normal(k[1], (2 * c_t, 1), jnp.float32),
        "theta": s * jax.random.normal(k[2], (ks, c_t, c_t), jnp.float32),
        "theta_b": s * jax.random.normal(k[3], (c_t, 1), jnp.float32),
        "graph_kernel": s * jax.random.normal(k[4], (n_route, ks * n_route), jnp.float32),
        "w2": s * jax.random.normal(k[5], (c_oo, kt * c_t), jnp.float32),
        "b2": jnp.zeros((c_oo, 1), jnp.float32),
        "gamma": jnp.ones((c_oo, 1), jnp.float32),   # BatchNorm2d default init
        "beta": jnp.zeros((c_oo, 1), jnp.float32),
    }


if __name__ == "__main__":
    B, c_si, c_t, c_oo = 2, 4, 8, 8      # channels = [c_si, c_t, c_oo]
    T, N = 16, 16                        # time_step, n_route
    ks, kt, dilation = 3, 3, 1
    keep_prob = 0.1                      # used as DROP prob, matching F.dropout(x, keep_prob)
    seed = 42                            # traced (no recompilation per seed)

    key = jax.random.PRNGKey(0)
    k_x, k_p = jax.random.split(key)
    x = jax.random.normal(k_x, (B, c_si, T, N), jnp.float32)     # NCHW like PyTorch
    params = init_params(k_p, ks=ks, kt=kt, c_si=c_si, c_t=c_t, c_oo=c_oo, n_route=N)

    out = st_conv_block(x, params, seed, ks=ks, kt=kt, dilation=dilation,
                        keep_prob=keep_prob)
    out = jax.block_until_ready(out)

    t_final = T - 2 * dilation * (kt - 1)
    assert out.shape == (B, c_oo, t_final, N), out.shape
    assert bool(jnp.all(jnp.isfinite(out)))
    # TODO(synk): dropout mask / BN batch statistics cannot bit-match torch's RNG / running stats.
    print("KERNEL_OK")
</pallas_src>

<mosaic_0001>
module attributes {stable_mosaic.version = 11 : i64} {
  func.func @kern(%arg0: i32, %arg1: memref<2x4x256xf32, #tpu.memory_space<vmem>>, %arg2: memref<16x12xf32, #tpu.memory_space<vmem>>, %arg3: memref<16x1xf32, #tpu.memory_space<vmem>>, %arg4: memref<3x8x8xf32, #tpu.memory_space<vmem>>, %arg5: memref<8x1xf32, #tpu.memory_space<vmem>>, %arg6: memref<3x224x224xf32, #tpu.memory_space<vmem>>, %arg7: memref<8x24xf32, #tpu.memory_space<vmem>>, %arg8: memref<8x1xf32, #tpu.memory_space<vmem>>, %arg9: memref<8x1xf32, #tpu.memory_space<vmem>>, %arg10: memref<8x1xf32, #tpu.memory_space<vmem>>, %arg11: memref<8x384xf32, #tpu.memory_space<vmem>>, %arg12: memref<2x8x192xf32, #tpu.memory_space<vmem>>) attributes {dimension_semantics = [#tpu.dimension_semantics<arbitrary>], iteration_bounds = array<i64: 1>, scalar_prefetch = 0 : i64, scratch_operands = 0 : i64, tpu.core_type = #tpu.core_type<tc>, window_params = [{pipeline_mode = #tpu.pipeline_mode<synchronous>, transform_indices = @transform_0, window_bounds = array<i64: 2, 4, 256>}, {pipeline_mode = #tpu.pipeline_mode<synchronous>, transform_indices = @transform_1, window_bounds = array<i64: 16, 12>}, {pipeline_mode = #tpu.pipeline_mode<synchronous>, transform_indices = @transform_2, window_bounds = array<i64: 16, 1>}, {pipeline_mode = #tpu.pipeline_mode<synchronous>, transform_indices = @transform_3, window_bounds = array<i64: 3, 8, 8>}, {pipeline_mode = #tpu.pipeline_mode<synchronous>, transform_indices = @transform_4, window_bounds = array<i64: 8, 1>}, {pipeline_mode = #tpu.pipeline_mode<synchronous>, transform_indices = @transform_5, window_bounds = array<i64: 3, 224, 224>}, {pipeline_mode = #tpu.pipeline_mode<synchronous>, transform_indices = @transform_6, window_bounds = array<i64: 8, 24>}, {pipeline_mode = #tpu.pipeline_mode<synchronous>, transform_indices = @transform_7, window_bounds = array<i64: 8, 1>}, {pipeline_mode = #tpu.pipeline_mode<synchronous>, transform_indices = @transform_8, window_bounds = array<i64: 8, 1>}, {pipeline_mode = #tpu.pipeline_mode<synchronous>, transform_indices = @transform_9, window_bounds = array<i64: 8, 1>}, {pipeline_mode = #tpu.pipeline_mode<synchronous>, transform_indices = @transform_10, window_bounds = array<i64: 8, 384>}, {pipeline_mode = #tpu.pipeline_mode<synchronous>, transform_indices = @transform_11, window_bounds = array<i64: 2, 8, 192>}]} {
    %c0 = arith.constant 0 : index
    %c0_0 = arith.constant 0 : index
    %c0_1 = arith.constant 0 : index
    %0 = vector.load %arg1[%c0, %c0_0, %c0_1] : memref<2x4x256xf32, #tpu.memory_space<vmem>>, vector<1x4x256xf32>
    %1 = vector.shape_cast %0 : vector<1x4x256xf32> to vector<4x256xf32>
    %c0_2 = arith.constant 0 : index
    %c0_3 = arith.constant 0 : index
    %2 = vector.load %arg2[%c0_2, %c0_3] : memref<16x12xf32, #tpu.memory_space<vmem>>, vector<16x12xf32>
    %c0_4 = arith.constant 0 : index
    %c0_5 = arith.constant 0 : index
    %3 = vector.load %arg3[%c0_4, %c0_5] : memref<16x1xf32, #tpu.memory_space<vmem>>, vector<16x1xf32>
    %4 = vector.extract_strided_slice %1 {offsets = [0, 0], sizes = [4, 224], strides = [1, 1]} : vector<4x256xf32> to vector<4x224xf32>
    %5 = vector.extract_strided_slice %1 {offsets = [0, 16], sizes = [4, 224], strides = [1, 1]} : vector<4x256xf32> to vector<4x224xf32>
    %6 = vector.extract_strided_slice %1 {offsets = [0, 32], sizes = [4, 224], strides = [1, 1]} : vector<4x256xf32> to vector<4x224xf32>
    %7 = tpu.concatenate %4, %5, %6 in 0 : vector<4x224xf32>, vector<4x224xf32>, vector<4x224xf32> -> vector<12x224xf32>
    %cst = arith.constant dense<0.000000e+00> : vector<16x224xf32>
    %8 = tpu.matmul %2, %7, %cst {dimension_numbers = #tpu.dot_dimension_numbers<[1], [0], [0], [1], [0, 0, 1, 1], [], []>} : vector<16x12xf32>, vector<12x224xf32>, vector<16x224xf32> -> vector<16x224xf32>
    %9 = vector.broadcast %3 : vector<16x1xf32> to vector<16x224xf32>
    %10 = arith.addf %8, %9 : vector<16x224xf32>
    %11 = vector.extract_strided_slice %10 {offsets = [0, 0], sizes = [8, 224], strides = [1, 1]} : vector<16x224xf32> to vector<8x224xf32>
    %12 = vector.extract_strided_slice %10 {offsets = [8, 0], sizes = [8, 224], strides = [1, 1]} : vector<16x224xf32> to vector<8x224xf32>
    %13 = vector.extract_strided_slice %1 {offsets = [0, 32], sizes = [4, 224], strides = [1, 1]} : vector<4x256xf32> to vector<4x224xf32>
    %cst_6 = arith.constant 0.000000e+00 : f32
    %14 = vector.broadcast %cst_6 : f32 to vector<4x224xf32>
    %15 = tpu.concatenate %13, %14 in 0 : vector<4x224xf32>, vector<4x224xf32> -> vector<8x224xf32>
    %16 = arith.addf %11, %15 : vector<8x224xf32>
    %17 = arith.negf %12 : vector<8x224xf32>
    %18 = math.exp %17 : vector<8x224xf32>
    %cst_7 = arith.constant 1.000000e+00 : f32
    %19 = vector.broadcast %cst_7 : f32 to vector<8x224xf32>
    %20 = arith.addf %19, %18 : vector<8x224xf32>
    %21 = arith.divf %19, %20 : vector<8x224xf32>
    %22 = arith.mulf %16, %21 : vector<8x224xf32>
    %cst_8 = arith.constant 0.000000e+00 : f32
    %23 = vector.broadcast %cst_8 : f32 to vector<8x224xf32>
    %c0_9 = arith.constant 0 : index
    %c0_10 = arith.constant 0 : index
    %c0_11 = arith.constant 0 : index
    %24 = vector.load %arg4[%c0_9, %c0_10, %c0_11] : memref<3x8x8xf32, #tpu.memory_space<vmem>>, vector<1x8x8xf32>
    %25 = vector.shape_cast %24 : vector<1x8x8xf32> to vector<8x8xf32>
    %cst_12 = arith.constant dense<0.000000e+00> : vector<8x224xf32>
    %26 = tpu.matmul %25, %22, %cst_12 {dimension_numbers = #tpu.dot_dimension_numbers<[1], [0], [0], [1], [0, 0, 1, 1], [], []>} : vector<8x8xf32>, vector<8x224xf32>, vector<8x224xf32> -> vector<8x224xf32>
    %c0_13 = arith.constant 0 : index
    %c0_14 = arith.constant 0 : index
    %c0_15 = arith.constant 0 : index
    %27 = vector.load %arg6[%c0_13, %c0_14, %c0_15] : memref<3x224x224xf32, #tpu.memory_space<vmem>>, vector<1x224x224xf32>
    %28 = vector.shape_cast %27 : vector<1x224x224xf32> to vector<224x224xf32>
    %cst_16 = arith.constant dense<0.000000e+00> : vector<8x224xf32>
    %29 = tpu.matmul %26, %28, %cst_16 {dimension_numbers = #tpu.dot_dimension_numbers<[1], [0], [0], [1], [0, 0, 1, 1], [], []>} : vector<8x224xf32>, vector<224x224xf32>, vector<8x224xf32> -> vector<8x224xf32>
    %30 = arith.addf %23, %29 : vector<8x224xf32>
    %c1 = arith.constant 1 : index
    %c0_17 = arith.constant 0 : index
    %c0_18 = arith.constant 0 : index
    %31 = vector.load %arg4[%c1, %c0_17, %c0_18] : memref<3x8x8xf32, #tpu.memory_space<vmem>>, vector<1x8x8xf32>
    %32 = vector.shape_cast %31 : vector<1x8x8xf32> to vector<8x8xf32>
    %cst_19 = arith.constant dense<0.000000e+00> : vector<8x224xf32>
    %33 = tpu.matmul %32, %22, %cst_19 {dimension_numbers = #tpu.dot_dimension_numbers<[1], [0], [0], [1], [0, 0, 1, 1], [], []>} : vector<8x8xf32>, vector<8x224xf32>, vector<8x224xf32> -> vector<8x224xf32>
    %c1_20 = arith.constant 1 : index
    %c0_21 = arith.constant 0 : index
    %c0_22 = arith.constant 0 : index
    %34 = vector.load %arg6[%c1_20, %c0_21, %c0_22] : memref<3x224x224xf32, #tpu.memory_space<vmem>>, vector<1x224x224xf32>
    %35 = vector.shape_cast %34 : vector<1x224x224xf32> to vector<224x224xf32>
    %cst_23 = arith.constant dense<0.000000e+00> : vector<8x224xf32>
    %36 = tpu.matmul %33, %35, %cst_23 {dimension_numbers = #tpu.dot_dimension_numbers<[1], [0], [0], [1], [0, 0, 1, 1], [], []>} : vector<8x224xf32>, vector<224x224xf32>, vector<8x224xf32> -> vector<8x224xf32>
    %37 = arith.addf %30, %36 : vector<8x224xf32>
    %c2 = arith.constant 2 : index
    %c0_24 = arith.constant 0 : index
    %c0_25 = arith.constant 0 : index
    %38 = vector.load %arg4[%c2, %c0_24, %c0_25] : memref<3x8x8xf32, #tpu.memory_space<vmem>>, vector<1x8x8xf32>
    %39 = vector.shape_cast %38 : vector<1x8x8xf32> to vector<8x8xf32>
    %cst_26 = arith.constant dense<0.000000e+00> : vector<8x224xf32>
    %40 = tpu.matmul %39, %22, %cst_26 {dimension_numbers = #tpu.dot_dimension_numbers<[1], [0], [0], [1], [0, 0, 1, 1], [], []>} : vector<8x8xf32>, vector<8x224xf32>, vector<8x224xf32> -> vector<8x224xf32>
    %c2_27 = arith.constant 2 : index
    %c0_28 = arith.constant 0 : index
    %c0_29 = arith.constant 0 : index
    %41 = vector.load %arg6[%c2_27, %c0_28, %c0_29] : memref<3x224x224xf32, #tpu.memory_space<vmem>>, vector<1x224x224xf32>
    %42 = vector.shape_cast %41 : vector<1x224x224xf32> to vector<224x224xf32>
    %cst_30 = arith.constant dense<0.000000e+00> : vector<8x224xf32>
    %43 = tpu.matmul %40, %42, %cst_30 {dimension_numbers = #tpu.dot_dimension_numbers<[1], [0], [0], [1], [0, 0, 1, 1], [], []>} : vector<8x224xf32>, vector<224x224xf32>, vector<8x224xf32> -> vector<8x224xf32>
    %44 = arith.addf %37, %43 : vector<8x224xf32>
    %c0_31 = arith.constant 0 : index
    %c0_32 = arith.constant 0 : index
    %45 = vector.load %arg5[%c0_31, %c0_32] : memref<8x1xf32, #tpu.memory_space<vmem>>, vector<8x1xf32>
    %46 = vector.broadcast %45 : vector<8x1xf32> to vector<8x224xf32>
    %47 = arith.addf %44, %46 : vector<8x224xf32>
    %48 = arith.addf %47, %22 : vector<8x224xf32>
    %cst_33 = arith.constant 0.000000e+00 : f32
    %49 = vector.broadcast %cst_33 : f32 to vector<8x224xf32>
    %50 = arith.maximumf %48, %49 : vector<8x224xf32>
    %c0_34 = arith.constant 0 : index
    %c0_35 = arith.constant 0 : index
    %51 = vector.load %arg7[%c0_34, %c0_35] : memref<8x24xf32, #tpu.memory_space<vmem>>, vector<8x24xf32>
    %c0_36 = arith.constant 0 : index
    %c0_37 = arith.constant 0 : index
    %52 = vector.load %arg8[%c0_36, %c0_37] : memref<8x1xf32, #tpu.memory_space<vmem>>, vector<8x1xf32>
    %53 = vector.extract_strided_slice %50 {offsets = [0, 0], sizes = [8, 192], strides = [1, 1]} : vector<8x224xf32> to vector<8x192xf32>
    %54 = vector.extract_strided_slice %50 {offsets = [0, 16], sizes = [8, 192], strides = [1, 1]} : vector<8x224xf32> to vector<8x192xf32>
    %55 = vector.extract_strided_slice %50 {offsets = [0, 32], sizes = [8, 192], strides = [1, 1]} : vector<8x224xf32> to vector<8x192xf32>
    %56 = tpu.concatenate %53, %54, %55 in 0 : vector<8x192xf32>, vector<8x192xf32>, vector<8x192xf32> -> vector<24x192xf32>
    %cst_38 = arith.constant dense<0.000000e+00> : vector<8x192xf32>
    %57 = tpu.matmul %51, %56, %cst_38 {dimension_numbers = #tpu.dot_dimension_numbers<[1], [0], [0], [1], [0, 0, 1, 1], [], []>} : vector<8x24xf32>, vector<24x192xf32>, vector<8x192xf32> -> vector<8x192xf32>
    %58 = vector.broadcast %52 : vector<8x1xf32> to vector<8x192xf32>
    %59 = arith.addf %57, %58 : vector<8x192xf32>
    %60 = vector.extract_strided_slice %50 {offsets = [0, 32], sizes = [8, 192], strides = [1, 1]} : vector<8x224xf32> to vector<8x192xf32>
    %61 = arith.addf %59, %60 : vector<8x192xf32>
    %cst_39 = arith.constant 0.000000e+00 : f32
    %62 = vector.broadcast %cst_39 : f32 to vector<8x192xf32>
    %63 = arith.maximumf %61, %62 : vector<8x192xf32>
    %c1_40 = arith.constant 1 : index
    %c0_41 = arith.constant 0 : index
    %c0_42 = arith.constant 0 : index
    %64 = vector.load %arg1[%c1_40, %c0_41, %c0_42] : memref<2x4x256xf32, #tpu.memory_space<vmem>>, vector<1x4x256xf32>
    %65 = vector.shape_cast %64 : vector<1x4x256xf32> to vector<4x256xf32>
    %c0_43 = arith.constant 0 : index
    %c0_44 = arith.constant 0 : index
    %66 = vector.load %arg2[%c0_43, %c0_44] : memref<16x12xf32, #tpu.memory_space<vmem>>, vector<16x12xf32>
    %c0_45 = arith.constant 0 : index
    %c0_46 = arith.constant 0 : index
    %67 = vector.load %arg3[%c0_45, %c0_46] : memref<16x1xf32, #tpu.memory_space<vmem>>, vector<16x1xf32>
    %68 = vector.extract_strided_slice %65 {offsets = [0, 0], sizes = [4, 224], strides = [1, 1]} : vector<4x256xf32> to vector<4x224xf32>
    %69 = vector.extract_strided_slice %65 {offsets = [0, 16], sizes = [4, 224], strides = [1, 1]} : vector<4x256xf32> to vector<4x224xf32>
    %70 = vector.extract_strided_slice %65 {offsets = [0, 32], sizes = [4, 224], strides = [1, 1]} : vector<4x256xf32> to vector<4x224xf32>
    %71 = tpu.concatenate %68, %69, %70 in 0 : vector<4x224xf32>, vector<4x224xf32>, vector<4x224xf32> -> vector<12x224xf32>
    %cst_47 = arith.constant dense<0.000000e+00> : vector<16x224xf32>
    %72 = tpu.matmul %66, %71, %cst_47 {dimension_numbers = #tpu.dot_dimension_numbers<[1], [0], [0], [1], [0, 0, 1, 1], [], []>} : vector<16x12xf32>, vector<12x224xf32>, vector<16x224xf32> -> vector<16x224xf32>
    %73 = vector.broadcast %67 : vector<16x1xf32> to vector<16x224xf32>
    %74 = arith.addf %72, %73 : vector<16x224xf32>
    %75 = vector.extract_strided_slice %74 {offsets = [0, 0], sizes = [8, 224], strides = [1, 1]} : vector<16x224xf32> to vector<8x224xf32>
    %76 = vector.extract_strided_slice %74 {offsets = [8, 0], sizes = [8, 224], strides = [1, 1]} : vector<16x224xf32> to vector<8x224xf32>
    %77 = vector.extract_strided_slice %65 {offsets = [0, 32], sizes = [4, 224], strides = [1, 1]} : vector<4x256xf32> to vector<4x224xf32>
    %cst_48 = arith.constant 0.000000e+00 : f32
    %78 = vector.broadcast %cst_48 : f32 to vector<4x224xf32>
    %79 = tpu.concatenate %77, %78 in 0 : vector<4x224xf32>, vector<4x224xf32> -> vector<8x224xf32>
    %80 = arith.addf %75, %79 : vector<8x224xf32>
    %81 = arith.negf %76 : vector<8x224xf32>
    %82 = math.exp %81 : vector<8x224xf32>
    %cst_49 = arith.constant 1.000000e+00 : f32
    %83 = vector.broadcast %cst_49 : f32 to vector<8x224xf32>
    %84 = arith.addf %83, %82 : vector<8x224xf32>
    %85 = arith.divf %83, %84 : vector<8x224xf32>
    %86 = arith.mulf %80, %85 : vector<8x224xf32>
    %cst_50 = arith.constant 0.000000e+00 : f32
    %87 = vector.broadcast %cst_50 : f32 to vector<8x224xf32>
    %c0_51 = arith.constant 0 : index
    %c0_52 = arith.constant 0 : index
    %c0_53 = arith.constant 0 : index
    %88 = vector.load %arg4[%c0_51, %c0_52, %c0_53] : memref<3x8x8xf32, #tpu.memory_space<vmem>>, vector<1x8x8xf32>
    %89 = vector.shape_cast %88 : vector<1x8x8xf32> to vector<8x8xf32>
    %cst_54 = arith.constant dense<0.000000e+00> : vector<8x224xf32>
    %90 = tpu.matmul %89, %86, %cst_54 {dimension_numbers = #tpu.dot_dimension_numbers<[1], [0], [0], [1], [0, 0, 1, 1], [], []>} : vector<8x8xf32>, vector<8x224xf32>, vector<8x224xf32> -> vector<8x224xf32>
    %c0_55 = arith.constant 0 : index
    %c0_56 = arith.constant 0 : index
    %c0_57 = arith.constant 0 : index
    %91 = vector.load %arg6[%c0_55, %c0_56, %c0_57] : memref<3x224x224xf32, #tpu.memory_space<vmem>>, vector<1x224x224xf32>
    %92 = vector.shape_cast %91 : vector<1x224x224xf32> to vector<224x224xf32>
    %cst_58 = arith.constant dense<0.000000e+00> : vector<8x224xf32>
    %93 = tpu.matmul %90, %92, %cst_58 {dimension_numbers = #tpu.dot_dimension_numbers<[1], [0], [0], [1], [0, 0, 1, 1], [], []>} : vector<8x224xf32>, vector<224x224xf32>, vector<8x224xf32> -> vector<8x224xf32>
    %94 = arith.addf %87, %93 : vector<8x224xf32>
    %c1_59 = arith.constant 1 : index
    %c0_60 = arith.constant 0 : index
    %c0_61 = arith.constant 0 : index
    %95 = vector.load %arg4[%c1_59, %c0_60, %c0_61] : memref<3x8x8xf32, #tpu.memory_space<vmem>>, vector<1x8x8xf32>
    %96 = vector.shape_cast %95 : vector<1x8x8xf32> to vector<8x8xf32>
    %cst_62 = arith.constant dense<0.000000e+00> : vector<8x224xf32>
    %97 = tpu.matmul %96, %86, %cst_62 {dimension_numbers = #tpu.dot_dimension_numbers<[1], [0], [0], [1], [0, 0, 1, 1], [], []>} : vector<8x8xf32>, vector<8x224xf32>, vector<8x224xf32> -> vector<8x224xf32>
    %c1_63 = arith.constant 1 : index
    %c0_64 = arith.constant 0 : index
    %c0_65 = arith.constant 0 : index
    %98 = vector.load %arg6[%c1_63, %c0_64, %c0_65] : memref<3x224x224xf32, #tpu.memory_space<vmem>>, vector<1x224x224xf32>
    %99 = vector.shape_cast %98 : vector<1x224x224xf32> to vector<224x224xf32>
    %cst_66 = arith.constant dense<0.000000e+00> : vector<8x224xf32>
    %100 = tpu.matmul %97, %99, %cst_66 {dimension_numbers = #tpu.dot_dimension_numbers<[1], [0], [0], [1], [0, 0, 1, 1], [], []>} : vector<8x224xf32>, vector<224x224xf32>, vector<8x224xf32> -> vector<8x224xf32>
    %101 = arith.addf %94, %100 : vector<8x224xf32>
    %c2_67 = arith.constant 2 : index
    %c0_68 = arith.constant 0 : index
    %c0_69 = arith.constant 0 : index
    %102 = vector.load %arg4[%c2_67, %c0_68, %c0_69] : memref<3x8x8xf32, #tpu.memory_space<vmem>>, vector<1x8x8xf32>
    %103 = vector.shape_cast %102 : vector<1x8x8xf32> to vector<8x8xf32>
    %cst_70 = arith.constant dense<0.000000e+00> : vector<8x224xf32>
    %104 = tpu.matmul %103, %86, %cst_70 {dimension_numbers = #tpu.dot_dimension_numbers<[1], [0], [0], [1], [0, 0, 1, 1], [], []>} : vector<8x8xf32>, vector<8x224xf32>, vector<8x224xf32> -> vector<8x224xf32>
    %c2_71 = arith.constant 2 : index
    %c0_72 = arith.constant 0 : index
    %c0_73 = arith.constant 0 : index
    %105 = vector.load %arg6[%c2_71, %c0_72, %c0_73] : memref<3x224x224xf32, #tpu.memory_space<vmem>>, vector<1x224x224xf32>
    %106 = vector.shape_cast %105 : vector<1x224x224xf32> to vector<224x224xf32>
    %cst_74 = arith.constant dense<0.000000e+00> : vector<8x224xf32>
    %107 = tpu.matmul %104, %106, %cst_74 {dimension_numbers = #tpu.dot_dimension_numbers<[1], [0], [0], [1], [0, 0, 1, 1], [], []>} : vector<8x224xf32>, vector<224x224xf32>, vector<8x224xf32> -> vector<8x224xf32>
    %108 = arith.addf %101, %107 : vector<8x224xf32>
    %c0_75 = arith.constant 0 : index
    %c0_76 = arith.constant 0 : index
    %109 = vector.load %arg5[%c0_75, %c0_76] : memref<8x1xf32, #tpu.memory_space<vmem>>, vector<8x1xf32>
    %110 = vector.broadcast %109 : vector<8x1xf32> to vector<8x224xf32>
    %111 = arith.addf %108, %110 : vector<8x224xf32>
    %112 = arith.addf %111, %86 : vector<8x224xf32>
    %cst_77 = arith.constant 0.000000e+00 : f32
    %113 = vector.broadcast %cst_77 : f32 to vector<8x224xf32>
    %114 = arith.maximumf %112, %113 : vector<8x224xf32>
    %c0_78 = arith.constant 0 : index
    %c0_79 = arith.constant 0 : index
    %115 = vector.load %arg7[%c0_78, %c0_79] : memref<8x24xf32, #tpu.memory_space<vmem>>, vector<8x24xf32>
    %c0_80 = arith.constant 0 : index
    %c0_81 = arith.constant 0 : index
    %116 = vector.load %arg8[%c0_80, %c0_81] : memref<8x1xf32, #tpu.memory_space<vmem>>, vector<8x1xf32>
    %117 = vector.extract_strided_slice %114 {offsets = [0, 0], sizes = [8, 192], strides = [1, 1]} : vector<8x224xf32> to vector<8x192xf32>
    %118 = vector.extract_strided_slice %114 {offsets = [0, 16], sizes = [8, 192], strides = [1, 1]} : vector<8x224xf32> to vector<8x192xf32>
    %119 = vector.extract_strided_slice %114 {offsets = [0, 32], sizes = [8, 192], strides = [1, 1]} : vector<8x224xf32> to vector<8x192xf32>
    %120 = tpu.concatenate %117, %118, %119 in 0 : vector<8x192xf32>, vector<8x192xf32>, vector<8x192xf32> -> vector<24x192xf32>
    %cst_82 = arith.constant dense<0.000000e+00> : vector<8x192xf32>
    %121 = tpu.matmul %115, %120, %cst_82 {dimension_numbers = #tpu.dot_dimension_numbers<[1], [0], [0], [1], [0, 0, 1, 1], [], []>} : vector<8x24xf32>, vector<24x192xf32>, vector<8x192xf32> -> vector<8x192xf32>
    %122 = vector.broadcast %116 : vector<8x1xf32> to vector<8x192xf32>
    %123 = arith.addf %121, %122 : vector<8x192xf32>
    %124 = vector.extract_strided_slice %114 {offsets = [0, 32], sizes = [8, 192], strides = [1, 1]} : vector<8x224xf32> to vector<8x192xf32>
    %125 = arith.addf %123, %124 : vector<8x192xf32>
    %cst_83 = arith.constant 0.000000e+00 : f32
    %126 = vector.broadcast %cst_83 : f32 to vector<8x192xf32>
    %127 = arith.maximumf %125, %126 : vector<8x192xf32>
    %128 = tpu.concatenate %63, %127 in 1 : vector<8x192xf32>, vector<8x192xf32> -> vector<8x384xf32>
    %cst_84 = arith.constant dense<0.000000e+00> : vector<8xf32>
    %129 = vector.multi_reduction <add>, %128, %cst_84 [1] : vector<8x384xf32> to vector<8xf32>
    %130 = vector.shape_cast %129 : vector<8xf32> to vector<8x1xf32>
    %cst_85 = arith.constant 3.840000e+02 : f32
    %131 = vector.broadcast %cst_85 : f32 to vector<8x1xf32>
    %132 = arith.divf %130, %131 : vector<8x1xf32>
    %133 = arith.mulf %128, %128 : vector<8x384xf32>
    %cst_86 = arith.constant dense<0.000000e+00> : vector<8xf32>
    %134 = vector.multi_reduction <add>, %133, %cst_86 [1] : vector<8x384xf32> to vector<8xf32>
    %135 = vector.shape_cast %134 : vector<8xf32> to vector<8x1xf32>
    %cst_87 = arith.constant 3.840000e+02 : f32
    %136 = vector.broadcast %cst_87 : f32 to vector<8x1xf32>
    %137 = arith.divf %135, %136 : vector<8x1xf32>
    %138 = arith.mulf %132, %132 : vector<8x1xf32>
    %139 = arith.subf %137, %138 : vector<8x1xf32>
    %140 = vector.broadcast %132 : vector<8x1xf32> to vector<8x384xf32>
    %141 = arith.subf %128, %140 : vector<8x384xf32>
    %cst_88 = arith.constant 9.99999974E-6 : f32
    %142 = vector.broadcast %cst_88 : f32 to vector<8x1xf32>
    %143 = arith.addf %139, %142 : vector<8x1xf32>
    %144 = math.rsqrt %143 : vector<8x1xf32>
    %145 = vector.broadcast %144 : vector<8x1xf32> to vector<8x384xf32>
    %146 = arith.mulf %141, %145 : vector<8x384xf32>
    %c0_89 = arith.constant 0 : index
    %c0_90 = arith.constant 0 : index
    %147 = vector.load %arg9[%c0_89, %c0_90] : memref<8x1xf32, #tpu.memory_space<vmem>>, vector<8x1xf32>
    %148 = vector.broadcast %147 : vector<8x1xf32> to vector<8x384xf32>
    %149 = arith.mulf %146, %148 : vector<8x384xf32>
    %c0_91 = arith.constant 0 : index
    %c0_92 = arith.constant 0 : index
    %150 = vector.load %arg10[%c0_91, %c0_92] : memref<8x1xf32, #tpu.memory_space<vmem>>, vector<8x1xf32>
    %151 = vector.broadcast %150 : vector<8x1xf32> to vector<8x384xf32>
    %152 = arith.addf %149, %151 : vector<8x384xf32>
    %c0_93 = arith.constant 0 : index
    %c0_94 = arith.constant 0 : index
    %153 = vector.load %arg11[%c0_93, %c0_94] : memref<8x384xf32, #tpu.memory_space<vmem>>, vector<8x384xf32>
    %cst_95 = arith.constant 1.000000e-01 : f32
    %154 = vector.broadcast %cst_95 : f32 to vector<8x384xf32>
    %155 = arith.cmpf oge, %153, %154 : vector<8x384xf32>
    %cst_96 = arith.constant 1.11111116 : f32
    %156 = vector.broadcast %cst_96 : f32 to vector<8x384xf32>
    %157 = arith.mulf %152, %156 : vector<8x384xf32>
    %cst_97 = arith.constant 0.000000e+00 : f32
    %158 = vector.broadcast %cst_97 : f32 to vector<8x384xf32>
    %159 = arith.select %155, %157, %158 : vector<8x384xi1>, vector<8x384xf32>
    %160 = vector.extract_strided_slice %159 {offsets = [0, 0], sizes = [8, 192], strides = [1, 1]} : vector<8x384xf32> to vector<8x192xf32>
    %c0_98 = arith.constant 0 : index
    %c0_99 = arith.constant 0 : index
    %c0_100 = arith.constant 0 : index
    %161 = vector.load %arg12[%c0_98, %c0_99, %c0_100] : memref<2x8x192xf32, #tpu.memory_space<vmem>>, vector<1x8x192xf32>
    %162 = vector.shape_cast %161 : vector<1x8x192xf32> to vector<8x192xf32>
    %163 = vector.shape_cast %160 : vector<8x192xf32> to vector<1x8x192xf32>
    tpu.vector_store %arg12[%c0_98, %c0_99, %c0_100], %163 {strides = array<i32>} : memref<2x8x192xf32, #tpu.memory_space<vmem>>, vector<1x8x192xf32>,
    %164 = vector.extract_strided_slice %159 {offsets = [0, 192], sizes = [8, 192], strides = [1, 1]} : vector<8x384xf32> to vector<8x192xf32>
    %c1_101 = arith.constant 1 : index
    %c0_102 = arith.constant 0 : index
    %c0_103 = arith.constant 0 : index
    %165 = vector.load %arg12[%c1_101, %c0_102, %c0_103] : memref<2x8x192xf32, #tpu.memory_space<vmem>>, vector<1x8x192xf32>
    %166 = vector.shape_cast %165 : vector<1x8x192xf32> to vector<8x192xf32>
    %167 = vector.shape_cast %164 : vector<8x192xf32> to vector<1x8x192xf32>
    tpu.vector_store %arg12[%c1_101, %c0_102, %c0_103], %167 {strides = array<i32>} : memref<2x8x192xf32, #tpu.memory_space<vmem>>, vector<1x8x192xf32>,
    return
  }
  func.func @transform_0(%arg0: i32) -> (i32, i32, i32) {
    %c0_i32 = arith.constant 0 : i32
    %c0_i32_0 = arith.constant 0 : i32
    %c0_i32_1 = arith.constant 0 : i32
    %c0_i32_2 = arith.constant 0 : i32
    return %c0_i32, %c0_i32_0, %c0_i32_1 : i32, i32, i32
  }
  func.func @transform_1(%arg0: i32) -> (i32, i32) {
    %c0_i32 = arith.constant 0 : i32
    %c0_i32_0 = arith.constant 0 : i32
    %c0_i32_1 = arith.constant 0 : i32
    return %c0_i32, %c0_i32_0 : i32, i32
  }
  func.func @transform_2(%arg0: i32) -> (i32, i32) {
    %c0_i32 = arith.constant 0 : i32
    %c0_i32_0 = arith.constant 0 : i32
    %c0_i32_1 = arith.constant 0 : i32
    return %c0_i32, %c0_i32_0 : i32, i32
  }
  func.func @transform_3(%arg0: i32) -> (i32, i32, i32) {
    %c0_i32 = arith.constant 0 : i32
    %c0_i32_0 = arith.constant 0 : i32
    %c0_i32_1 = arith.constant 0 : i32
    %c0_i32_2 = arith.constant 0 : i32
    return %c0_i32, %c0_i32_0, %c0_i32_1 : i32, i32, i32
  }
  func.func @transform_4(%arg0: i32) -> (i32, i32) {
    %c0_i32 = arith.constant 0 : i32
    %c0_i32_0 = arith.constant 0 : i32
    %c0_i32_1 = arith.constant 0 : i32
    return %c0_i32, %c0_i32_0 : i32, i32
  }
  func.func @transform_5(%arg0: i32) -> (i32, i32, i32) {
    %c0_i32 = arith.constant 0 : i32
    %c0_i32_0 = arith.constant 0 : i32
    %c0_i32_1 = arith.constant 0 : i32
    %c0_i32_2 = arith.constant 0 : i32
    return %c0_i32, %c0_i32_0, %c0_i32_1 : i32, i32, i32
  }
  func.func @transform_6(%arg0: i32) -> (i32, i32) {
    %c0_i32 = arith.constant 0 : i32
    %c0_i32_0 = arith.constant 0 : i32
    %c0_i32_1 = arith.constant 0 : i32
    return %c0_i32, %c0_i32_0 : i32, i32
  }
  func.func @transform_7(%arg0: i32) -> (i32, i32) {
    %c0_i32 = arith.constant 0 : i32
    %c0_i32_0 = arith.constant 0 : i32
    %c0_i32_1 = arith.constant 0 : i32
    return %c0_i32, %c0_i32_0 : i32, i32
  }
  func.func @transform_8(%arg0: i32) -> (i32, i32) {
    %c0_i32 = arith.constant 0 : i32
    %c0_i32_0 = arith.constant 0 : i32
    %c0_i32_1 = arith.constant 0 : i32
    return %c0_i32, %c0_i32_0 : i32, i32
  }
  func.func @transform_9(%arg0: i32) -> (i32, i32) {
    %c0_i32 = arith.constant 0 : i32
    %c0_i32_0 = arith.constant 0 : i32
    %c0_i32_1 = arith.constant 0 : i32
    return %c0_i32, %c0_i32_0 : i32, i32
  }
  func.func @transform_10(%arg0: i32) -> (i32, i32) {
    %c0_i32 = arith.constant 0 : i32
    %c0_i32_0 = arith.constant 0 : i32
    %c0_i32_1 = arith.constant 0 : i32
    return %c0_i32, %c0_i32_0 : i32, i32
  }
  func.func @transform_11(%arg0: i32) -> (i32, i32, i32) {
    %c0_i32 = arith.constant 0 : i32
    %c0_i32_0 = arith.constant 0 : i32
    %c0_i32_1 = arith.constant 0 : i32
    %c0_i32_2 = arith.constant 0 : i32
    return %c0_i32, %c0_i32_0, %c0_i32_1 : i32, i32, i32
  }
}

</mosaic_0001>

<llo_original>
// kernel: st_conv_block.1
$region0: #{st_conv_block.1}
  #allocation0 [shape = 'u32[]', space=smem, size = 0x4, offset = 0x4, fixed_abs, tag = 'smem constant byte address 0x4 - core index']
  #allocation1 [shape = 'u32[144,128]{1,0:T(1,128)}', space=vmem, size = 0x12000, scoped, tag = 'internal scratch']
  %s0 = inlined_call_operand.vmem [shape: f32[2,4,256], index: 0, kind: input, shape index: {}]
  %s1 = inlined_call_operand.vmem [shape: f32[16,12], index: 1, kind: input, shape index: {}]
  %s2 = inlined_call_operand.vmem [shape: f32[16,1], index: 2, kind: input, shape index: {}]
  %s3 = inlined_call_operand.vmem [shape: f32[3,8,8], index: 3, kind: input, shape index: {}]
  %s4 = inlined_call_operand.vmem [shape: f32[8,1], index: 4, kind: input, shape index: {}]
  %s5 = inlined_call_operand.vmem [shape: f32[3,224,224], index: 5, kind: input, shape index: {}]
  %s6 = inlined_call_operand.vmem [shape: f32[8,24], index: 6, kind: input, shape index: {}]
  %s7 = inlined_call_operand.vmem [shape: f32[8,1], index: 7, kind: input, shape index: {}]
  %s8 = inlined_call_operand.vmem [shape: f32[8,1], index: 8, kind: input, shape index: {}]
  %s9 = inlined_call_operand.vmem [shape: f32[8,1], index: 9, kind: input, shape index: {}]
  %s10 = inlined_call_operand.vmem [shape: f32[8,384], index: 10, kind: input, shape index: {}]
  %s11 = inlined_call_operand.vmem [shape: f32[2,8,192], index: 11, kind: output, shape index: {}]
  %s12 = sld [smem:[#allocation0]]
  $region54: #{st_conv_block.1} parent=0
    _
  %s14 = ssub.s32 1, %s12
  %s15 = scalar_select 0, %s14, %s12
  // Predicated region
  $region2: #{st_conv_block.1} parent=0 // pred_check
    _
  $region3: #{st_conv_block.1} parent=0 // pred_check_branch
    %17 = sbr.rel (0) target = $region5
  $region4: #{st_conv_block.1} parent=0 // pred_region
    _
  $region5: #{st_conv_block.1} parent=0 // pred_fallthru
    _
  // Predicated region
  $region6: #{st_conv_block.1} parent=0 // pred_check
    _
  $region7: #{st_conv_block.1} parent=0 // pred_check_branch
    %19 = sbr.rel (0) target = $region9
  $region8: #{st_conv_block.1} parent=0 // pred_region
    _
  $region9: #{st_conv_block.1} parent=0 // pred_fallthru
    _
  // Predicated region
  $region10: #{st_conv_block.1} parent=0 // pred_check
    _
  $region11: #{st_conv_block.1} parent=0 // pred_check_branch
    %21 = sbr.rel (0) target = $region13
  $region12: #{st_conv_block.1} parent=0 // pred_region
    _
  $region13: #{st_conv_block.1} parent=0 // pred_fallthru
    _
  // Predicated region
  $region14: #{st_conv_block.1} parent=0 // pred_check
    _
  $region15: #{st_conv_block.1} parent=0 // pred_check_branch
    %23 = sbr.rel (0) target = $region17
  $region16: #{st_conv_block.1} parent=0 // pred_region
    _
  $region17: #{st_conv_block.1} parent=0 // pred_fallthru
    _
  // Predicated region
  $region18: #{st_conv_block.1} parent=0 // pred_check
    _
  $region19: #{st_conv_block.1} parent=0 // pred_check_branch
    %25 = sbr.rel (0) target = $region21
  $region20: #{st_conv_block.1} parent=0 // pred_region
    _
  $region21: #{st_conv_block.1} parent=0 // pred_fallthru
    _
  // Predicated region
  $region22: #{st_conv_block.1} parent=0 // pred_check
    _
  $region23: #{st_conv_block.1} parent=0 // pred_check_branch
    %27 = sbr.rel (0) target = $region25
  $region24: #{st_conv_block.1} parent=0 // pred_region
    _
  $region25: #{st_conv_block.1} parent=0 // pred_fallthru
    _
  // Predicated region
  $region26: #{st_conv_block.1} parent=0 // pred_check
    _
  $region27: #{st_conv_block.1} parent=0 // pred_check_branch
    %29 = sbr.rel (0) target = $region29
  $region28: #{st_conv_block.1} parent=0 // pred_region
    _
  $region29: #{st_conv_block.1} parent=0 // pred_fallthru
    _
  // Predicated region
  $region30: #{st_conv_block.1} parent=0 // pred_check
    _
  $region31: #{st_conv_block.1} parent=0 // pred_check_branch
    %31 = sbr.rel (0) target = $region33
  $region32: #{st_conv_block.1} parent=0 // pred_region
    _
  $region33: #{st_conv_block.1} parent=0 // pred_fallthru
    _
  // Predicated region
  $region34: #{st_conv_block.1} parent=0 // pred_check
    _
  $region35: #{st_conv_block.1} parent=0 // pred_check_branch
    %33 = sbr.rel (0) target = $region37
  $region36: #{st_conv_block.1} parent=0 // pred_region
    _
  $region37: #{st_conv_block.1} parent=0 // pred_fallthru
    _
  // Predicated region
  $region38: #{st_conv_block.1} parent=0 // pred_check
    _
  $region39: #{st_conv_block.1} parent=0 // pred_check_branch
    %35 = sbr.rel (0) target = $region41
  $region40: #{st_conv_block.1} parent=0 // pred_region
    _
  $region41: #{st_conv_block.1} parent=0 // pred_fallthru
    _
  // Predicated region
  $region42: #{st_conv_block.1} parent=0 // pred_check
    _
  $region43: #{st_conv_block.1} parent=0 // pred_check_branch
    %37 = sbr.rel (0) target = $region45
  $region44: #{st_conv_block.1} parent=0 // pred_region
    _
  $region45: #{st_conv_block.1} parent=0 // pred_fallthru
    _
  %v38 = vld [vmem:[%s0] sm:$0xff]
  %v39 = vld [vmem:[%s1] sm:$0xff]
  %v40 = vld [vmem:[%s1 + $0x8] sm:$0xff]
  %v41 = vld [vmem:[%s2] sm:$0xff]
  %v42 = vld [vmem:[%s2 + $0x8] sm:$0xff]
  %v44 = vcombine.high %v38, %v38
  %v46 = vcombine.low %v38, %v38
  %47 = vrot.lane.b32.xlu0 %v46, 112
  %v48 = vpop.permute.xlu0 %47
  %49 = vrot.lane.b32.xlu0 %v38, 112
  %v50 = vpop.permute.xlu0 %49
  %vm51 = vcmask 916480
  %v52 = vsel %vm51, %v48, %v50
  %55 = vrot.lane.b32.xlu0 %v38, 96
  %v56 = vpop.permute.xlu0 %55
  %57 = vrot.lane.b32.xlu0 %v44, 96
  %v58 = vpop.permute.xlu0 %57
  %vm59 = vcmask 785408
  %v60 = vsel %vm59, %v56, %v58
  %vm61 = vcmask 1043456
  %v62 = vsel %vm61, %v38, %v52
  %v63 = vsel %vm61, %v44, %v50
  %65 = vset.pattern.permute.xlu0 0
  %66 = vperm.xlu0 %65, %v41
  %v67 = vpop.permute.xlu0 %66
  %70 = vset.pattern.permute.xlu0 0
  %71 = vperm.xlu0 %70, %v42
  %v72 = vpop.permute.xlu0 %71
  %vm74 = vcmask 97280
  %v76 = vsel %vm74, %v39, 0
  %v79 = vsel %vm74, %v40, 0
  %v81 = vsel %vm61, %v60, 0
  %v83 = vsel %vm61, %v58, 0
  %85 = vmatprep.subr.mxu0 %v63
  %86 = vmatpush1.msra.mxu0 %v62
  %87 = vmatprep.subr.mxu0 %v83
  %88 = vmatpush1.msra.mxu0 %v81
  %89 = vmatprep.subr.mxu0 0.0
  %90 = vmatpush1.msra.mxu0 0.0
  %91 = vmatprep.subr.mxu0 0.0
  %92 = vmatpush1.msra.mxu0 0.0
  %93 = vmatprep.subr.mxu0 0.0
  %94 = vmatpush1.msra.mxu0 0.0
  %95 = vmatprep.subr.mxu0 0.0
  %96 = vmatpush1.msra.mxu0 0.0
  %97 = vmatprep.subr.mxu0 0.0
  %98 = vmatpush1.msra.mxu0 0.0
  %99 = vmatprep.subr.mxu0 0.0
  %100 = vmatpush1.msra.mxu0 0.0
  %101 = vmatprep.subr.mxu0 0.0
  %102 = vmatpush1.msra.mxu0 0.0
  %103 = vmatprep.subr.mxu0 0.0
  %104 = vmatpush1.msra.mxu0 0.0
  %105 = vmatprep.subr.mxu0 0.0
  %106 = vmatpush1.msra.mxu0 0.0
  %107 = vmatprep.subr.mxu0 0.0
  %108 = vmatpush1.msra.mxu0 0.0
  %109 = vmatprep.subr.mxu0 0.0
  %110 = vmatpush1.msra.mxu0 0.0
  %111 = vmatprep.subr.mxu0 0.0
  %112 = vmatpush1.msra.mxu0 0.0
  %113 = vmatprep.subr.mxu0 0.0
  %114 = vmatpush1.msra.mxu0 0.0
  %115 = vmatprep.subr.mxu0 0.0
  %116 = vmatpush1.msra.mxu0 0.0
  %117 = vmatprep.subr.mxu0 0.0
  %118 = vmatpush1.msra.mxu0 0.0
  %119 = vmatprep.subr.mxu0 0.0
  %120 = vmatpush1.msra.mxu0 0.0
  %121 = vmatprep.subr.mxu0 0.0
  %122 = vmatpush1.msra.mxu0 0.0
  %123 = vmatprep.subr.mxu0 0.0
  %124 = vmatpush1.msra.mxu0 0.0
  %125 = vmatprep.subr.mxu0 0.0
  %126 = vmatpush1.msra.mxu0 0.0
  %127 = vmatprep.subr.mxu0 0.0
  %128 = vmatpush1.msra.mxu0 0.0
  %129 = vmatprep.subr.mxu0 0.0
  %130 = vmatpush1.msra.mxu0 0.0
  %131 = vmatprep.subr.mxu0 0.0
  %132 = vmatpush1.msra.mxu0 0.0
  %133 = vmatprep.subr.mxu0 0.0
  %134 = vmatpush1.msra.mxu0 0.0
  %135 = vmatprep.subr.mxu0 0.0
  %136 = vmatpush1.msra.mxu0 0.0
  %137 = vmatprep.subr.mxu0 0.0
  %138 = vmatpush1.msra.mxu0 0.0
  %139 = vmatprep.subr.mxu0 0.0
  %140 = vmatpush1.msra.mxu0 0.0
  %141 = vmatprep.subr.mxu0 0.0
  %142 = vmatpush1.msra.mxu0 0.0
  %143 = vmatprep.subr.mxu0 0.0
  %144 = vmatpush1.msra.mxu0 0.0
  %145 = vmatprep.subr.mxu0 0.0
  %146 = vmatpush1.msra.mxu0 0.0
  %147 = vmatprep.subr.mxu0 0.0
  %148 = vmatpush1.msra.mxu0 0.0
  %149 = vmatprep.mubr.f32.mxu0 0.0
  %150 = vmatmul.mubr.f32.gmra.mrb[0].mxu0 %v76
  %v151 = vpop.f32.mrb[0].mxu0
  %v152 = vadd.f32 %v67, %v151
  %v153 = vpop.f32.mrb[0].mxu0
  %v154 = vadd.f32 %v67, %v153
  %155 = vmatprep.mubr.f32.mxu0 0.0
  %156 = vmatmul.mubr.f32.gmra.mrb[0].mxu0 %v79
  %v157 = vpop.f32.mrb[0].mxu0
  %v158 = vadd.f32 %v72, %v157
  %v159 = vpop.f32.mrb[0].mxu0
  %v160 = vadd.f32 %v72, %v159
  %161 = vdwg.mxu0
  %v162 = vsel %vm61, %v38, 0.0
  %v163 = vsel %vm61, %v44, 0.0
  %166 = vrot.lane.b32.xlu0 %v162, 96
  %v167 = vpop.permute.xlu0 %166
  %168 = vrot.lane.b32.xlu0 %v163, 96
  %v169 = vpop.permute.xlu0 %168
  %v170 = vsel %vm59, %v167, %v169
  %v173 = vadd.f32 %v152, %v170
  %v174 = vadd.f32 %v154, %v169
  %v175 = vxor.u32 %v158, 2147483648
  %v176 = vxor.u32 %v160, 2147483648
  %v177 = vmul.f32 %v175, 1.442695
  %v178 = vpow.pop %v177
  %v179 = vmul.f32 %v176, 1.442695
  %v180 = vpow.pop %v179
  %v181 = vadd.f32 %v178, 1.0
  %v182 = vadd.f32 %v180, 1.0
  %v183 = vrcp.pop %v181
  %v184 = vmul.f32 1.0, %v183
  %v185 = vrcp.pop %v182
  %v186 = vmul.f32 1.0, %v185
  %v187 = vmul.f32 %v173, %v184
  %v188 = vmul.f32 %v174, %v186
  %v189 = vld [vmem:[%s3] sm:$0xff]
  %vm190 = vcmask 64512
  %v192 = vsel %vm190, %v189, 0
  %194 = vmatprep.subr.mxu0 %v188
  %195 = vmatpush1.msra.mxu0 %v187
  %196 = vmatprep.subr.mxu0 0.0
  %197 = vmatpush1.msra.mxu0 0.0
  %198 = vmatprep.subr.mxu0 0.0
  %199 = vmatpush1.msra.mxu0 0.0
  %200 = vmatprep.subr.mxu0 0.0
  %201 = vmatpush1.msra.mxu0 0.0
  %202 = vmatprep.subr.mxu0 0.0
  %203 = vmatpush1.msra.mxu0 0.0
  %204 = vmatprep.subr.mxu0 0.0
  %205 = vmatpush1.msra.mxu0 0.0
  %206 = vmatprep.subr.mxu0 0.0
  %207 = vmatpush1.msra.mxu0 0.0
  %208 = vmatprep.subr.mxu0 0.0
  %209 = vmatpush1.msra.mxu0 0.0
  %210 = vmatprep.subr.mxu0 0.0
  %211 = vmatpush1.msra.mxu0 0.0
  %212 = vmatprep.subr.mxu0 0.0
  %213 = vmatpush1.msra.mxu0 0.0
  %214 = vmatprep.subr.mxu0 0.0
  %215 = vmatpush1.msra.mxu0 0.0
  %216 = vmatprep.subr.mxu0 0.0
  %217 = vmatpush1.msra.mxu0 0.0
  %218 = vmatprep.subr.mxu0 0.0
  %219 = vmatpush1.msra.mxu0 0.0
  %220 = vmatprep.subr.mxu0 0.0
  %221 = vmatpush1.msra.mxu0 0.0
  %222 = vmatprep.subr.mxu0 0.0
  %223 = vmatpush1.msra.mxu0 0.0
  %224 = vmatprep.subr.mxu0 0.0
  %225 = vmatpush1.msra.mxu0 0.0
  %226 = vmatprep.subr.mxu0 0.0
  %227 = vmatpush1.msra.mxu0 0.0
  %228 = vmatprep.subr.mxu0 0.0
  %229 = vmatpush1.msra.mxu0 0.0
  %230 = vmatprep.subr.mxu0 0.0
  %231 = vmatpush1.msra.mxu0 0.0
  %232 = vmatprep.subr.mxu0 0.0
  %233 = vmatpush1.msra.mxu0 0.0
  %234 = vmatprep.subr.mxu0 0.0
  %235 = vmatpush1.msra.mxu0 0.0
  %236 = vmatprep.subr.mxu0 0.0
  %237 = vmatpush1.msra.mxu0 0.0
  %238 = vmatprep.subr.mxu0 0.0
  %239 = vmatpush1.msra.mxu0 0.0
  %240 = vmatprep.subr.mxu0 0.0
  %241 = vmatpush1.msra.mxu0 0.0
  %242 = vmatprep.subr.mxu0 0.0
  %243 = vmatpush1.msra.mxu0 0.0
  %244 = vmatprep.subr.mxu0 0.0
  %245 = vmatpush1.msra.mxu0 0.0
  %246 = vmatprep.subr.mxu0 0.0
  %247 = vmatpush1.msra.mxu0 0.0
  %248 = vmatprep.subr.mxu0 0.0
  %249 = vmatpush1.msra.mxu0 0.0
  %250 = vmatprep.subr.mxu0 0.0
  %251 = vmatpush1.msra.mxu0 0.0
  %252 = vmatprep.subr.mxu0 0.0
  %253 = vmatpush1.msra.mxu0 0.0
  %254 = vmatprep.subr.mxu0 0.0
  %255 = vmatpush1.msra.mxu0 0.0
  %256 = vmatprep.subr.mxu0 0.0
  %257 = vmatpush1.msra.mxu0 0.0
  %258 = vmatprep.mubr.f32.mxu0 0.0
  %259 = vmatmul.mubr.f32.gmra.mrb[0].mxu0 %v192
  %v260 = vpop.f32.mrb[0].mxu0
  %v261 = vadd.f32 0.0, %v260
  %v262 = vpop.f32.mrb[0].mxu0
  %v263 = vadd.f32 0.0, %v262
  %264 = vdwg.mxu0
  %v265 = vld [vmem:[%s5] sm:$0xff]
  %v266 = vld [vmem:[%s5 + $0x8] sm:$0xff]
  %v267 = vld [vmem:[%s5 + $0x10] sm:$0xff]
  %v268 = vld [vmem:[%s5 + $0x18] sm:$0xff]
  %v269 = vld [vmem:[%s5 + $0x20] sm:$0xff]
  %v270 = vld [vmem:[%s5 + $0x28] sm:$0xff]
  %v271 = vld [vmem:[%s5 + $0x30] sm:$0xff]
  %v272 = vld [vmem:[%s5 + $0x38] sm:$0xff]
  %v273 = vld [vmem:[%s5 + $0x40] sm:$0xff]
  %v274 = vld [vmem:[%s5 + $0x48] sm:$0xff]
  %v275 = vld [vmem:[%s5 + $0x50] sm:$0xff]
  %v276 = vld [vmem:[%s5 + $0x58] sm:$0xff]
  %v277 = vld [vmem:[%s5 + $0x60] sm:$0xff]
  %v278 = vld [vmem:[%s5 + $0x68] sm:$0xff]
  %v279 = vld [vmem:[%s5 + $0x70] sm:$0xff]
  %v280 = vld [vmem:[%s5 + $0x78] sm:$0xff]
  %v281 = vld [vmem:[%s5 + $0x80] sm:$0xff]
  %v282 = vld [vmem:[%s5 + $0x88] sm:$0xff]
  %v283 = vld [vmem:[%s5 + $0x90] sm:$0xff]
  %v284 = vld [vmem:[%s5 + $0x98] sm:$0xff]
  %v285 = vld [vmem:[%s5 + $0xa0] sm:$0xff]
  %v286 = vld [vmem:[%s5 + $0xa8] sm:$0xff]
  %v287 = vld [vmem:[%s5 + $0xb0] sm:$0xff]
  %v288 = vld [vmem:[%s5 + $0xb8] sm:$0xff]
  %v289 = vld [vmem:[%s5 + $0xc0] sm:$0xff]
  %v290 = vld [vmem:[%s5 + $0xc8] sm:$0xff]
  %v291 = vld [vmem:[%s5 + $0xd0] sm:$0xff]
  %v292 = vld [vmem:[%s5 + $0xd8] sm:$0xff]
  %v293 = vld [vmem:[%s5 + $0xe0] sm:$0xff]
  %v294 = vld [vmem:[%s5 + $0xe8] sm:$0xff]
  %v295 = vld [vmem:[%s5 + $0xf0] sm:$0xff]
  %v296 = vld [vmem:[%s5 + $0xf8] sm:$0xff]
  %v297 = vld [vmem:[%s5 + $0x100] sm:$0xff]
  %v298 = vld [vmem:[%s5 + $0x108] sm:$0xff]
  %v299 = vld [vmem:[%s5 + $0x110] sm:$0xff]
  %v300 = vld [vmem:[%s5 + $0x118] sm:$0xff]
  %v301 = vld [vmem:[%s5 + $0x120] sm:$0xff]
  %v302 = vld [vmem:[%s5 + $0x128] sm:$0xff]
  %v303 = vld [vmem:[%s5 + $0x130] sm:$0xff]
  %v304 = vld [vmem:[%s5 + $0x138] sm:$0xff]
  %v305 = vld [vmem:[%s5 + $0x140] sm:$0xff]
  %v306 = vld [vmem:[%s5 + $0x148] sm:$0xff]
  %v307 = vld [vmem:[%s5 + $0x150] sm:$0xff]
  %v308 = vld [vmem:[%s5 + $0x158] sm:$0xff]
  %v309 = vld [vmem:[%s5 + $0x160] sm:$0xff]
  %v310 = vld [vmem:[%s5 + $0x168] sm:$0xff]
  %v311 = vld [vmem:[%s5 + $0x170] sm:$0xff]
  %v312 = vld [vmem:[%s5 + $0x178] sm:$0xff]
  %v313 = vld [vmem:[%s5 + $0x180] sm:$0xff]
  %v314 = vld [vmem:[%s5 + $0x188] sm:$0xff]
  %v315 = vld [vmem:[%s5 + $0x190] sm:$0xff]
  %v316 = vld [vmem:[%s5 + $0x198] sm:$0xff]
  %v317 = vld [vmem:[%s5 + $0x1a0] sm:$0xff]
  %v318 = vld [vmem:[%s5 + $0x1a8] sm:$0xff]
  %v319 = vld [vmem:[%s5 + $0x1b0] sm:$0xff]
  %v320 = vld [vmem:[%s5 + $0x1b8] sm:$0xff]
  %s321 = scalar_lea.vmem %s3, 8
  %v322 = vld [vmem:[%s321] sm:$0xff]
  %v324 = vsel %vm190, %v322, 0
  %326 = vmatprep.subr.mxu0 %v188
  %327 = vmatpush1.msra.mxu0 %v187
  %328 = vmatprep.subr.mxu0 0.0
  %329 = vmatpush1.msra.mxu0 0.0
  %330 = vmatprep.subr.mxu0 0.0
  %331 = vmatpush1.msra.mxu0 0.0
  %332 = vmatprep.subr.mxu0 0.0
  %333 = vmatpush1.msra.mxu0 0.0
  %334 = vmatprep.subr.mxu0 0.0
  %335 = vmatpush1.msra.mxu0 0.0
  %336 = vmatprep.subr.mxu0 0.0
  %337 = vmatpush1.msra.mxu0 0.0
  %338 = vmatprep.subr.mxu0 0.0
  %339 = vmatpush1.msra.mxu0 0.0
  %340 = vmatprep.subr.mxu0 0.0
  %341 = vmatpush1.msra.mxu0 0.0
  %342 = vmatprep.subr.mxu0 0.0
  %343 = vmatpush1.msra.mxu0 0.0
  %344 = vmatprep.subr.mxu0 0.0
  %345 = vmatpush1.msra.mxu0 0.0
  %346 = vmatprep.subr.mxu0 0.0
  %347 = vmatpush1.msra.mxu0 0.0
  %348 = vmatprep.subr.mxu0 0.0
  %349 = vmatpush1.msra.mxu0 0.0
  %350 = vmatprep.subr.mxu0 0.0
  %351 = vmatpush1.msra.mxu0 0.0
  %352 = vmatprep.subr.mxu0 0.0
  %353 = vmatpush1.msra.mxu0 0.0
  %354 = vmatprep.subr.mxu0 0.0
  %355 = vmatpush1.msra.mxu0 0.0
  %356 = vmatprep.subr.mxu0 0.0
  %357 = vmatpush1.msra.mxu0 0.0
  %358 = vmatprep.subr.mxu0 0.0
  %359 = vmatpush1.msra.mxu0 0.0
  %360 = vmatprep.subr.mxu0 0.0
  %361 = vmatpush1.msra.mxu0 0.0
  %362 = vmatprep.subr.mxu0 0.0
  %363 = vmatpush1.msra.mxu0 0.0
  %364 = vmatprep.subr.mxu0 0.0
  %365 = vmatpush1.msra.mxu0 0.0
  %366 = vmatprep.subr.mxu0 0.0
  %367 = vmatpush1.msra.mxu0 0.0
  %368 = vmatprep.subr.mxu0 0.0
  %369 = vmatpush1.msra.mxu0 0.0
  %370 = vmatprep.subr.mxu0 0.0
  %371 = vmatpush1.msra.mxu0 0.0
  %372 = vmatprep.subr.mxu0 0.0
  %373 = vmatpush1.msra.mxu0 0.0
  %374 = vmatprep.subr.mxu0 0.0
  %375 = vmatpush1.msra.mxu0 0.0
  %376 = vmatprep.subr.mxu0 0.0
  %377 = vmatpush1.msra.mxu0 0.0
  %378 = vmatprep.subr.mxu0 0.0
  %379 = vmatpush1.msra.mxu0 0.0
  %380 = vmatprep.subr.mxu0 0.0
  %381 = vmatpush1.msra.mxu0 0.0
  %382 = vmatprep.subr.mxu0 0.0
  %383 = vmatpush1.msra.mxu0 0.0
  %384 = vmatprep.subr.mxu0 0.0
  %385 = vmatpush1.msra.mxu0 0.0
  %386 = vmatprep.subr.mxu0 0.0
  %387 = vmatpush1.msra.mxu0 0.0
  %388 = vmatprep.subr.mxu0 0.0
  %389 = vmatpush1.msra.mxu0 0.0
  %390 = vmatprep.mubr.f32.mxu0 0.0
  %391 = vmatmul.mubr.f32.gmra.mrb[0].mxu0 %v324
  %v392 = vpop.f32.mrb[0].mxu0
  %v393 = vadd.f32 0.0, %v392
  %v394 = vpop.f32.mrb[0].mxu0
  %v395 = vadd.f32 0.0, %v394
  %396 = vdwg.mxu0
  %s397 = scalar_lea.vmem %s5, 448
  %v398 = vld [vmem:[%s397] sm:$0xff]
  %v399 = vld [vmem:[%s397 + $0x8] sm:$0xff]
  %v400 = vld [vmem:[%s397 + $0x10] sm:$0xff]
  %v401 = vld [vmem:[%s397 + $0x18] sm:$0xff]
  %v402 = vld [vmem:[%s397 + $0x20] sm:$0xff]
  %v403 = vld [vmem:[%s397 + $0x28] sm:$0xff]
  %v404 = vld [vmem:[%s397 + $0x30] sm:$0xff]
  %v405 = vld [vmem:[%s397 + $0x38] sm:$0xff]
  %v406 = vld [vmem:[%s397 + $0x40] sm:$0xff]
  %v407 = vld [vmem:[%s397 + $0x48] sm:$0xff]
  %v408 = vld [vmem:[%s397 + $0x50] sm:$0xff]
  %v409 = vld [vmem:[%s397 + $0x58] sm:$0xff]
  %v410 = vld [vmem:[%s397 + $0x60] sm:$0xff]
  %v411 = vld [vmem:[%s397 + $0x68] sm:$0xff]
  %v412 = vld [vmem:[%s397 + $0x70] sm:$0xff]
  %v413 = vld [vmem:[%s397 + $0x78] sm:$0xff]
  %v414 = vld [vmem:[%s397 + $0x80] sm:$0xff]
  %v415 = vld [vmem:[%s397 + $0x88] sm:$0xff]
  %v416 = vld [vmem:[%s397 + $0x90] sm:$0xff]
  %v417 = vld [vmem:[%s397 + $0x98] sm:$0xff]
  %v418 = vld [vmem:[%s397 + $0xa0] sm:$0xff]
  %v419 = vld [vmem:[%s397 + $0xa8] sm:$0xff]
  %v420 = vld [vmem:[%s397 + $0xb0] sm:$0xff]
  %v421 = vld [vmem:[%s397 + $0xb8] sm:$0xff]
  %v422 = vld [vmem:[%s397 + $0xc0] sm:$0xff]
  %v423 = vld [vmem:[%s397 + $0xc8] sm:$0xff]
  %v424 = vld [vmem:[%s397 + $0xd0] sm:$0xff]
  %v425 = vld [vmem:[%s397 + $0xd8] sm:$0xff]
  %v426 = vld [vmem:[%s397 + $0xe0] sm:$0xff]
  %v427 = vld [vmem:[%s397 + $0xe8] sm:$0xff]
  %v428 = vld [vmem:[%s397 + $0xf0] sm:$0xff]
  %v429 = vld [vmem:[%s397 + $0xf8] sm:$0xff]
  %v430 = vld [vmem:[%s397 + $0x100] sm:$0xff]
  %v431 = vld [vmem:[%s397 + $0x108] sm:$0xff]
  %v432 = vld [vmem:[%s397 + $0x110] sm:$0xff]
  %v433 = vld [vmem:[%s397 + $0x118] sm:$0xff]
  %v434 = vld [vmem:[%s397 + $0x120] sm:$0xff]
  %v435 = vld [vmem:[%s397 + $0x128] sm:$0xff]
  %v436 = vld [vmem:[%s397 + $0x130] sm:$0xff]
  %v437 = vld [vmem:[%s397 + $0x138] sm:$0xff]
  %v438 = vld [vmem:[%s397 + $0x140] sm:$0xff]
  %v439 = vld [vmem:[%s397 + $0x148] sm:$0xff]
  %v440 = vld [vmem:[%s397 + $0x150] sm:$0xff]
  %v441 = vld [vmem:[%s397 + $0x158] sm:$0xff]
  %v442 = vld [vmem:[%s397 + $0x160] sm:$0xff]
  %v443 = vld [vmem:[%s397 + $0x168] sm:$0xff]
  %v444 = vld [vmem:[%s397 + $0x170] sm:$0xff]
  %v445 = vld [vmem:[%s397 + $0x178] sm:$0xff]
  %v446 = vld [vmem:[%s397 + $0x180] sm:$0xff]
  %v447 = vld [vmem:[%s397 + $0x188] sm:$0xff]
  %v448 = vld [vmem:[%s397 + $0x190] sm:$0xff]
  %v449 = vld [vmem:[%s397 + $0x198] sm:$0xff]
  %v450 = vld [vmem:[%s397 + $0x1a0] sm:$0xff]
  %v451 = vld [vmem:[%s397 + $0x1a8] sm:$0xff]
  %v452 = vld [vmem:[%s397 + $0x1b0] sm:$0xff]
  %v453 = vld [vmem:[%s397 + $0x1b8] sm:$0xff]
  %v455 = vsel %vm59, %v395, 0
  %457 = vmatprep.subr.mxu0 %v399
  %458 = vmatpush1.msra.mxu0 %v398
  %459 = vmatprep.subr.mxu0 %v401
  %460 = vmatpush1.msra.mxu0 %v400
  %461 = vmatprep.subr.mxu0 %v403
  %462 = vmatpush1.msra.mxu0 %v402
  %463 = vmatprep.subr.mxu0 %v405
  %464 = vmatpush1.msra.mxu0 %v404
  %465 = vmatprep.subr.mxu0 %v407
  %466 = vmatpush1.msra.mxu0 %v406
  %467 = vmatprep.subr.mxu0 %v409
  %468 = vmatpush1.msra.mxu0 %v408
  %469 = vmatprep.subr.mxu0 %v411
  %470 = vmatpush1.msra.mxu0 %v410
  %471 = vmatprep.subr.mxu0 %v413
  %472 = vmatpush1.msra.mxu0 %v412
  %473 = vmatprep.subr.mxu0 %v415
  %474 = vmatpush1.msra.mxu0 %v414
  %475 = vmatprep.subr.mxu0 %v417
  %476 = vmatpush1.msra.mxu0 %v416
  %477 = vmatprep.subr.mxu0 %v419
  %478 = vmatpush1.msra.mxu0 %v418
  %479 = vmatprep.subr.mxu0 %v421
  %480 = vmatpush1.msra.mxu0 %v420
  %481 = vmatprep.subr.mxu0 %v423
  %482 = vmatpush1.msra.mxu0 %v422
  %483 = vmatprep.subr.mxu0 %v425
  %484 = vmatpush1.msra.mxu0 %v424
  %485 = vmatprep.subr.mxu0 %v427
  %486 = vmatpush1.msra.mxu0 %v426
  %487 = vmatprep.subr.mxu0 %v429
  %488 = vmatpush1.msra.mxu0 %v428
  %489 = vmatprep.subr.mxu0 %v431
  %490 = vmatpush1.msra.mxu0 %v430
  %491 = vmatprep.subr.mxu0 %v433
  %492 = vmatpush1.msra.mxu0 %v432
  %493 = vmatprep.subr.mxu0 %v435
  %494 = vmatpush1.msra.mxu0 %v434
  %495 = vmatprep.subr.mxu0 %v437
  %496 = vmatpush1.msra.mxu0 %v436
  %497 = vmatprep.subr.mxu0 %v439
  %498 = vmatpush1.msra.mxu0 %v438
  %499 = vmatprep.subr.mxu0 %v441
  %500 = vmatpush1.msra.mxu0 %v440
  %501 = vmatprep.subr.mxu0 %v443
  %502 = vmatpush1.msra.mxu0 %v442
  %503 = vmatprep.subr.mxu0 %v445
  %504 = vmatpush1.msra.mxu0 %v444
  %505 = vmatprep.subr.mxu0 %v447
  %506 = vmatpush1.msra.mxu0 %v446
  %507 = vmatprep.subr.mxu0 %v449
  %508 = vmatpush1.msra.mxu0 %v448
  %509 = vmatprep.subr.mxu0 %v451
  %510 = vmatpush1.msra.mxu0 %v450
  %511 = vmatprep.subr.mxu0 %v453
  %512 = vmatpush1.msra.mxu0 %v452
  %513 = vmatprep.subr.mxu0 0.0
  %514 = vmatpush1.msra.mxu0 0.0
  %515 = vmatprep.subr.mxu0 0.0
  %516 = vmatpush1.msra.mxu0 0.0
  %517 = vmatprep.subr.mxu0 0.0
  %518 = vmatpush1.msra.mxu0 0.0
  %519 = vmatprep.subr.mxu0 0.0
  %520 = vmatpush1.msra.mxu0 0.0
  %521 = vmatprep.mubr.f32.mxu0 %v455
  %522 = vmatmul.mubr.f32.gmra.mrb[0].mxu0 %v393
  %v523 = vpop.f32.mrb[0].mxu0
  %v524 = vadd.f32 0.0, %v523
  %v525 = vpop.f32.mrb[0].mxu0
  %v526 = vadd.f32 0.0, %v525
  %527 = vdwg.mxu0
  %v529 = vsel %vm59, %v263, 0
  %531 = vmatprep.subr.mxu0 %v266
  %532 = vmatpush1.msra.mxu0 %v265
  %533 = vmatprep.subr.mxu0 %v268
  %534 = vmatpush1.msra.mxu0 %v267
  %535 = vmatprep.subr.mxu0 %v270
  %536 = vmatpush1.msra.mxu0 %v269
  %537 = vmatprep.subr.mxu0 %v272
  %538 = vmatpush1.msra.mxu0 %v271
  %539 = vmatprep.subr.mxu0 %v274
  %540 = vmatpush1.msra.mxu0 %v273
  %541 = vmatprep.subr.mxu0 %v276
  %542 = vmatpush1.msra.mxu0 %v275
  %543 = vmatprep.subr.mxu0 %v278
  %544 = vmatpush1.msra.mxu0 %v277
  %545 = vmatprep.subr.mxu0 %v280
  %546 = vmatpush1.msra.mxu0 %v279
  %547 = vmatprep.subr.mxu0 %v282
  %548 = vmatpush1.msra.mxu0 %v281
  %549 = vmatprep.subr.mxu0 %v284
  %550 = vmatpush1.msra.mxu0 %v283
  %551 = vmatprep.subr.mxu0 %v286
  %552 = vmatpush1.msra.mxu0 %v285
  %553 = vmatprep.subr.mxu0 %v288
  %554 = vmatpush1.msra.mxu0 %v287
  %555 = vmatprep.subr.mxu0 %v290
  %556 = vmatpush1.msra.mxu0 %v289
  %557 = vmatprep.subr.mxu0 %v292
  %558 = vmatpush1.msra.mxu0 %v291
  %559 = vmatprep.subr.mxu0 %v294
  %560 = vmatpush1.msra.mxu0 %v293
  %561 = vmatprep.subr.mxu0 %v296
  %562 = vmatpush1.msra.mxu0 %v295
  %563 = vmatprep.subr.mxu0 %v298
  %564 = vmatpush1.msra.mxu0 %v297
  %565 = vmatprep.subr.mxu0 %v300
  %566 = vmatpush1.msra.mxu0 %v299
  %567 = vmatprep.subr.mxu0 %v302
  %568 = vmatpush1.msra.mxu0 %v301
  %569 = vmatprep.subr.mxu0 %v304
  %570 = vmatpush1.msra.mxu0 %v303
  %571 = vmatprep.subr.mxu0 %v306
  %572 = vmatpush1.msra.mxu0 %v305
  %573 = vmatprep.subr.mxu0 %v308
  %574 = vmatpush1.msra.mxu0 %v307
  %575 = vmatprep.subr.mxu0 %v310
  %576 = vmatpush1.msra.mxu0 %v309
  %577 = vmatprep.subr.mxu0 %v312
  %578 = vmatpush1.msra.mxu0 %v311
  %579 = vmatprep.subr.mxu0 %v314
  %580 = vmatpush1.msra.mxu0 %v313
  %581 = vmatprep.subr.mxu0 %v316
  %582 = vmatpush1.msra.mxu0 %v315
  %583 = vmatprep.subr.mxu0 %v318
  %584 = vmatpush1.msra.mxu0 %v317
  %585 = vmatprep.subr.mxu0 %v320
  %586 = vmatpush1.msra.mxu0 %v319
  %587 = vmatprep.subr.mxu0 0.0
  %588 = vmatpush1.msra.mxu0 0.0
  %589 = vmatprep.subr.mxu0 0.0
  %590 = vmatpush1.msra.mxu0 0.0
  %591 = vmatprep.subr.mxu0 0.0
  %592 = vmatpush1.msra.mxu0 0.0
  %593 = vmatprep.subr.mxu0 0.0
  %594 = vmatpush1.msra.mxu0 0.0
  %595 = vmatprep.mubr.f32.mxu0 %v529
  %596 = vmatmul.mubr.f32.gmra.mrb[0].mxu0 %v261
  %v597 = vpop.f32.mrb[0].mxu0
  %v598 = vadd.f32 %v524, %v597
  %v599 = vpop.f32.mrb[0].mxu0
  %v600 = vadd.f32 %v526, %v599
  %601 = vdwg.mxu0
  %s602 = scalar_lea.vmem %s3, 16
  %v603 = vld [vmem:[%s602] sm:$0xff]
  %v605 = vsel %vm190, %v603, 0
  %607 = vmatprep.subr.mxu0 %v188
  %608 = vmatpush1.msra.mxu0 %v187
  %609 = vmatprep.subr.mxu0 0.0
  %610 = vmatpush1.msra.mxu0 0.0
  %611 = vmatprep.subr.mxu0 0.0
  %612 = vmatpush1.msra.mxu0 0.0
  %613 = vmatprep.subr.mxu0 0.0
  %614 = vmatpush1.msra.mxu0 0.0
  %615 = vmatprep.subr.mxu0 0.0
  %616 = vmatpush1.msra.mxu0 0.0
  %617 = vmatprep.subr.mxu0 0.0
  %618 = vmatpush1.msra.mxu0 0.0
  %619 = vmatprep.subr.mxu0 0.0
  %620 = vmatpush1.msra.mxu0 0.0
  %621 = vmatprep.subr.mxu0 0.0
  %622 = vmatpush1.msra.mxu0 0.0
  %623 = vmatprep.subr.mxu0 0.0
  %624 = vmatpush1.msra.mxu0 0.0
  %625 = vmatprep.subr.mxu0 0.0
  %626 = vmatpush1.msra.mxu0 0.0
  %627 = vmatprep.subr.mxu0 0.0
  %628 = vmatpush1.msra.mxu0 0.0
  %629 = vmatprep.subr.mxu0 0.0
  %630 = vmatpush1.msra.mxu0 0.0
  %631 = vmatprep.subr.mxu0 0.0
  %632 = vmatpush1.msra.mxu0 0.0
  %633 = vmatprep.subr.mxu0 0.0
  %634 = vmatpush1.msra.mxu0 0.0
  %635 = vmatprep.subr.mxu0 0.0
  %636 = vmatpush1.msra.mxu0 0.0
  %637 = vmatprep.subr.mxu0 0.0
  %638 = vmatpush1.msra.mxu0 0.0
  %639 = vmatprep.subr.mxu0 0.0
  %640 = vmatpush1.msra.mxu0 0.0
  %641 = vmatprep.subr.mxu0 0.0
  %642 = vmatpush1.msra.mxu0 0.0
  %643 = vmatprep.subr.mxu0 0.0
  %644 = vmatpush1.msra.mxu0 0.0
  %645 = vmatprep.subr.mxu0 0.0
  %646 = vmatpush1.msra.mxu0 0.0
  %647 = vmatprep.subr.mxu0 0.0
  %648 = vmatpush1.msra.mxu0 0.0
  %649 = vmatprep.subr.mxu0 0.0
  %650 = vmatpush1.msra.mxu0 0.0
  %651 = vmatprep.subr.mxu0 0.0
  %652 = vmatpush1.msra.mxu0 0.0
  %653 = vmatprep.subr.mxu0 0.0
  %654 = vmatpush1.msra.mxu0 0.0
  %655 = vmatprep.subr.mxu0 0.0
  %656 = vmatpush1.msra.mxu0 0.0
  %657 = vmatprep.subr.mxu0 0.0
  %658 = vmatpush1.msra.mxu0 0.0
  %659 = vmatprep.subr.mxu0 0.0
  %660 = vmatpush1.msra.mxu0 0.0
  %661 = vmatprep.subr.mxu0 0.0
  %662 = vmatpush1.msra.mxu0 0.0
  %663 = vmatprep.subr.mxu0 0.0
  %664 = vmatpush1.msra.mxu0 0.0
  %665 = vmatprep.subr.mxu0 0.0
  %666 = vmatpush1.msra.mxu0 0.0
  %667 = vmatprep.subr.mxu0 0.0
  %668 = vmatpush1.msra.mxu0 0.0
  %669 = vmatprep.subr.mxu0 0.0
  %670 = vmatpush1.msra.mxu0 0.0
  %671 = vmatprep.mubr.f32.mxu0 0.0
  %672 = vmatmul.mubr.f32.gmra.mrb[0].mxu0 %v605
  %v673 = vpop.f32.mrb[0].mxu0
  %v674 = vadd.f32 0.0, %v673
  %v675 = vpop.f32.mrb[0].mxu0
  %v676 = vadd.f32 0.0, %v675
  %677 = vdwg.mxu0
  %s678 = scalar_lea.vmem %s5, 896
  %v679 = vld [vmem:[%s678] sm:$0xff]
  %v680 = vld [vmem:[%s678 + $0x8] sm:$0xff]
  %v681 = vld [vmem:[%s678 + $0x10] sm:$0xff]
  %v682 = vld [vmem:[%s678 + $0x18] sm:$0xff]
  %v683 = vld [vmem:[%s678 + $0x20] sm:$0xff]
  %v684 = vld [vmem:[%s678 + $0x28] sm:$0xff]
  %v685 = vld [vmem:[%s678 + $0x30] sm:$0xff]
  %v686 = vld [vmem:[%s678 + $0x38] sm:$0xff]
  %v687 = vld [vmem:[%s678 + $0x40] sm:$0xff]
  %v688 = vld [vmem:[%s678 + $0x48] sm:$0xff]
  %v689 = vld [vmem:[%s678 + $0x50] sm:$0xff]
  %v690 = vld [vmem:[%s678 + $0x58] sm:$0xff]
  %v691 = vld [vmem:[%s678 + $0x60] sm:$0xff]
  %v692 = vld [vmem:[%s678 + $0x68] sm:$0xff]
  %v693 = vld [vmem:[%s678 + $0x70] sm:$0xff]
  %v694 = vld [vmem:[%s678 + $0x78] sm:$0xff]
  %v695 = vld [vmem:[%s678 + $0x80] sm:$0xff]
  %v696 = vld [vmem:[%s678 + $0x88] sm:$0xff]
  %v697 = vld [vmem:[%s678 + $0x90] sm:$0xff]
  %v698 = vld [vmem:[%s678 + $0x98] sm:$0xff]
  %v699 = vld [vmem:[%s678 + $0xa0] sm:$0xff]
  %v700 = vld [vmem:[%s678 + $0xa8] sm:$0xff]
  %v701 = vld [vmem:[%s678 + $0xb0] sm:$0xff]
  %v702 = vld [vmem:[%s678 + $0xb8] sm:$0xff]
  %v703 = vld [vmem:[%s678 + $0xc0] sm:$0xff]
  %v704 = vld [vmem:[%s678 + $0xc8] sm:$0xff]
  %v705 = vld [vmem:[%s678 + $0xd0] sm:$0xff]
  %v706 = vld [vmem:[%s678 + $0xd8] sm:$0xff]
  %v707 = vld [vmem:[%s678 + $0xe0] sm:$0xff]
  %v708 = vld [vmem:[%s678 + $0xe8] sm:$0xff]
  %v709 = vld [vmem:[%s678 + $0xf0] sm:$0xff]
  %v710 = vld [vmem:[%s678 + $0xf8] sm:$0xff]
  %v711 = vld [vmem:[%s678 + $0x100] sm:$0xff]
  %v712 = vld [vmem:[%s678 + $0x108] sm:$0xff]
  %v713 = vld [vmem:[%s678 + $0x110] sm:$0xff]
  %v714 = vld [vmem:[%s678 + $0x118] sm:$0xff]
  %v715 = vld [vmem:[%s678 + $0x120] sm:$0xff]
  %v716 = vld [vmem:[%s678 + $0x128] sm:$0xff]
  %v717 = vld [vmem:[%s678 + $0x130] sm:$0xff]
  %v718 = vld [vmem:[%s678 + $0x138] sm:$0xff]
  %v719 = vld [vmem:[%s678 + $0x140] sm:$0xff]
  %v720 = vld [vmem:[%s678 + $0x148] sm:$0xff]
  %v721 = vld [vmem:[%s678 + $0x150] sm:$0xff]
  %v722 = vld [vmem:[%s678 + $0x158] sm:$0xff]
  %v723 = vld [vmem:[%s678 + $0x160] sm:$0xff]
  %v724 = vld [vmem:[%s678 + $0x168] sm:$0xff]
  %v725 = vld [vmem:[%s678 + $0x170] sm:$0xff]
  %v726 = vld [vmem:[%s678 + $0x178] sm:$0xff]
  %v727 = vld [vmem:[%s678 + $0x180] sm:$0xff]
  %v728 = vld [vmem:[%s678 + $0x188] sm:$0xff]
  %v729 = vld [vmem:[%s678 + $0x190] sm:$0xff]
  %v730 = vld [vmem:[%s678 + $0x198] sm:$0xff]
  %v731 = vld [vmem:[%s678 + $0x1a0] sm:$0xff]
  %v732 = vld [vmem:[%s678 + $0x1a8] sm:$0xff]
  %v733 = vld [vmem:[%s678 + $0x1b0] sm:$0xff]
  %v734 = vld [vmem:[%s678 + $0x1b8] sm:$0xff]
  %v736 = vsel %vm59, %v676, 0
  %738 = vmatprep.subr.mxu0 %v680
  %739 = vmatpush1.msra.mxu0 %v679
  %740 = vmatprep.subr.mxu0 %v682
  %741 = vmatpush1.msra.mxu0 %v681
  %742 = vmatprep.subr.mxu0 %v684
  %743 = vmatpush1.msra.mxu0 %v683
  %744 = vmatprep.subr.mxu0 %v686
  %745 = vmatpush1.msra.mxu0 %v685
  %746 = vmatprep.subr.mxu0 %v688
  %747 = vmatpush1.msra.mxu0 %v687
  %748 = vmatprep.subr.mxu0 %v690
  %749 = vmatpush1.msra.mxu0 %v689
  %750 = vmatprep.subr.mxu0 %v692
  %751 = vmatpush1.msra.mxu0 %v691
  %752 = vmatprep.subr.mxu0 %v694
  %753 = vmatpush1.msra.mxu0 %v693
  %754 = vmatprep.subr.mxu0 %v696
  %755 = vmatpush1.msra.mxu0 %v695
  %756 = vmatprep.subr.mxu0 %v698
  %757 = vmatpush1.msra.mxu0 %v697
  %758 = vmatprep.subr.mxu0 %v700
  %759 = vmatpush1.msra.mxu0 %v699
  %760 = vmatprep.subr.mxu0 %v702
  %761 = vmatpush1.msra.mxu0 %v701
  %762 = vmatprep.subr.mxu0 %v704
  %763 = vmatpush1.msra.mxu0 %v703
  %764 = vmatprep.subr.mxu0 %v706
  %765 = vmatpush1.msra.mxu0 %v705
  %766 = vmatprep.subr.mxu0 %v708
  %767 = vmatpush1.msra.mxu0 %v707
  %768 = vmatprep.subr.mxu0 %v710
  %769 = vmatpush1.msra.mxu0 %v709
  %770 = vmatprep.subr.mxu0 %v712
  %771 = vmatpush1.msra.mxu0 %v711
  %772 = vmatprep.subr.mxu0 %v714
  %773 = vmatpush1.msra.mxu0 %v713
  %774 = vmatprep.subr.mxu0 %v716
  %775 = vmatpush1.msra.mxu0 %v715
  %776 = vmatprep.subr.mxu0 %v718
  %777 = vmatpush1.msra.mxu0 %v717
  %778 = vmatprep.subr.mxu0 %v720
  %779 = vmatpush1.msra.mxu0 %v719
  %780 = vmatprep.subr.mxu0 %v722
  %781 = vmatpush1.msra.mxu0 %v721
  %782 = vmatprep.subr.mxu0 %v724
  %783 = vmatpush1.msra.mxu0 %v723
  %784 = vmatprep.subr.mxu0 %v726
  %785 = vmatpush1.msra.mxu0 %v725
  %786 = vmatprep.subr.mxu0 %v728
  %787 = vmatpush1.msra.mxu0 %v727
  %788 = vmatprep.subr.mxu0 %v730
  %789 = vmatpush1.msra.mxu0 %v729
  %790 = vmatprep.subr.mxu0 %v732
  %791 = vmatpush1.msra.mxu0 %v731
  %792 = vmatprep.subr.mxu0 %v734
  %793 = vmatpush1.msra.mxu0 %v733
  %794 = vmatprep.subr.mxu0 0.0
  %795 = vmatpush1.msra.mxu0 0.0
  %796 = vmatprep.subr.mxu0 0.0
  %797 = vmatpush1.msra.mxu0 0.0
  %798 = vmatprep.subr.mxu0 0.0
  %799 = vmatpush1.msra.mxu0 0.0
  %800 = vmatprep.subr.mxu0 0.0
  %801 = vmatpush1.msra.mxu0 0.0
  %802 = vmatprep.mubr.f32.mxu0 %v736
  %803 = vmatmul.mubr.f32.gmra.mrb[0].mxu0 %v674
  %v804 = vpop.f32.mrb[0].mxu0
  %v805 = vadd.f32 0.0, %v804
  %v806 = vpop.f32.mrb[0].mxu0
  %v807 = vadd.f32 0.0, %v806
  %808 = vdwg.mxu0
  %v809 = vadd.f32 %v598, %v805
  %v810 = vadd.f32 %v600, %v807
  %v811 = vld [vmem:[%s4] sm:$0xff]
  %813 = vset.pattern.permute.xlu0 0
  %814 = vperm.xlu0 %813, %v811
  %v815 = vpop.permute.xlu0 %814
  %v817 = vadd.f32 %v809, %v815
  %v818 = vadd.f32 %v810, %v815
  %v819 = vadd.f32 %v817, %v187
  %v820 = vadd.f32 %v818, %v188
  %v821 = vmax.f32 %v819, 0.0
  %v822 = vmax.f32 %v820, 0.0
  %v823 = vld [vmem:[%s6] sm:$0xff]
  %v824 = vld [vmem:[%s7] sm:$0xff]
  %827 = vrot.lane.b32.xlu0 %v821, 112
  %v828 = vpop.permute.xlu0 %827
  %829 = vrot.lane.b32.xlu0 %v822, 112
  %v830 = vpop.permute.xlu0 %829
  %v831 = vsel %vm51, %v828, %v830
  %834 = vrot.lane.b32.xlu0 %v821, 96
  %v835 = vpop.permute.xlu0 %834
  %836 = vrot.lane.b32.xlu0 %v822, 96
  %v837 = vpop.permute.xlu0 %836
  %v838 = vsel %vm59, %v835, %v837
  %842 = vset.pattern.permute.xlu0 0
  %843 = vperm.xlu0 %842, %v824
  %v844 = vpop.permute.xlu0 %843
  %vm846 = vcmask 195584
  %v848 = vsel %vm846, %v823, 0
  %850 = vmatprep.subr.mxu0 %v822
  %851 = vmatpush1.msra.mxu0 %v821
  %852 = vmatprep.subr.mxu0 %v830
  %853 = vmatpush1.msra.mxu0 %v831
  %854 = vmatprep.subr.mxu0 %v837
  %855 = vmatpush1.msra.mxu0 %v838
  %856 = vmatprep.subr.mxu0 0.0
  %857 = vmatpush1.msra.mxu0 0.0
  %858 = vmatprep.subr.mxu0 0.0
  %859 = vmatpush1.msra.mxu0 0.0
  %860 = vmatprep.subr.mxu0 0.0
  %861 = vmatpush1.msra.mxu0 0.0
  %862 = vmatprep.subr.mxu0 0.0
  %863 = vmatpush1.msra.mxu0 0.0
  %864 = vmatprep.subr.mxu0 0.0
  %865 = vmatpush1.msra.mxu0 0.0
  %866 = vmatprep.subr.mxu0 0.0
  %867 = vmatpush1.msra.mxu0 0.0
  %868 = vmatprep.subr.mxu0 0.0
  %869 = vmatpush1.msra.mxu0 0.0
  %870 = vmatprep.subr.mxu0 0.0
  %871 = vmatpush1.msra.mxu0 0.0
  %872 = vmatprep.subr.mxu0 0.0
  %873 = vmatpush1.msra.mxu0 0.0
  %874 = vmatprep.subr.mxu0 0.0
  %875 = vmatpush1.msra.mxu0 0.0
  %876 = vmatprep.subr.mxu0 0.0
  %877 = vmatpush1.msra.mxu0 0.0
  %878 = vmatprep.subr.mxu0 0.0
  %879 = vmatpush1.msra.mxu0 0.0
  %880 = vmatprep.subr.mxu0 0.0
  %881 = vmatpush1.msra.mxu0 0.0
  %882 = vmatprep.subr.mxu0 0.0
  %883 = vmatpush1.msra.mxu0 0.0
  %884 = vmatprep.subr.mxu0 0.0
  %885 = vmatpush1.msra.mxu0 0.0
  %886 = vmatprep.subr.mxu0 0.0
  %887 = vmatpush1.msra.mxu0 0.0
  %888 = vmatprep.subr.mxu0 0.0
  %889 = vmatpush1.msra.mxu0 0.0
  %890 = vmatprep.subr.mxu0 0.0
  %891 = vmatpush1.msra.mxu0 0.0
  %892 = vmatprep.subr.mxu0 0.0
  %893 = vmatpush1.msra.mxu0 0.0
  %894 = vmatprep.subr.mxu0 0.0
  %895 = vmatpush1.msra.mxu0 0.0
  %896 = vmatprep.subr.mxu0 0.0
  %897 = vmatpush1.msra.mxu0 0.0
  %898 = vmatprep.subr.mxu0 0.0
  %899 = vmatpush1.msra.mxu0 0.0
  %900 = vmatprep.subr.mxu0 0.0
  %901 = vmatpush1.msra.mxu0 0.0
  %902 = vmatprep.subr.mxu0 0.0
  %903 = vmatpush1.msra.mxu0 0.0
  %904 = vmatprep.subr.mxu0 0.0
  %905 = vmatpush1.msra.mxu0 0.0
  %906 = vmatprep.subr.mxu0 0.0
  %907 = vmatpush1.msra.mxu0 0.0
  %908 = vmatprep.subr.mxu0 0.0
  %909 = vmatpush1.msra.mxu0 0.0
  %910 = vmatprep.subr.mxu0 0.0
  %911 = vmatpush1.msra.mxu0 0.0
  %912 = vmatprep.subr.mxu0 0.0
  %913 = vmatpush1.msra.mxu0 0.0
  %914 = vmatprep.mubr.f32.mxu0 0.0
  %915 = vmatmul.mubr.f32.gmra.mrb[0].mxu0 %v848
  %v916 = vpop.f32.mrb[0].mxu0
  %v917 = vadd.f32 %v844, %v916
  %v918 = vpop.f32.mrb[0].mxu0
  %v919 = vadd.f32 %v844, %v918
  %920 = vdwg.mxu0
  %v921 = vadd.f32 %v917, %v838
  %v922 = vadd.f32 %v919, %v837
  %v923 = vmax.f32 %v921, 0.0
  %v924 = vmax.f32 %v922, 0.0
  %s925 = scalar_lea.vmem %s0, 8
  %v926 = vld [vmem:[%s925] sm:$0xff]
  %v928 = vcombine.high %v926, %v926
  %v930 = vcombine.low %v926, %v926
  %931 = vrot.lane.b32.xlu0 %v930, 112
  %v932 = vpop.permute.xlu0 %931
  %933 = vrot.lane.b32.xlu0 %v926, 112
  %v934 = vpop.permute.xlu0 %933
  %v935 = vsel %vm51, %v932, %v934
  %938 = vrot.lane.b32.xlu0 %v926, 96
  %v939 = vpop.permute.xlu0 %938
  %940 = vrot.lane.b32.xlu0 %v928, 96
  %v941 = vpop.permute.xlu0 %940
  %v942 = vsel %vm59, %v939, %v941
  %v943 = vsel %vm61, %v926, %v935
  %v944 = vsel %vm61, %v928, %v934
  %v945 = vsel %vm61, %v942, 0
  %v947 = vsel %vm61, %v941, 0
  %949 = vmatprep.subr.mxu0 %v944
  %950 = vmatpush1.msra.mxu0 %v943
  %951 = vmatprep.subr.mxu0 %v947
  %952 = vmatpush1.msra.mxu0 %v945
  %953 = vmatprep.subr.mxu0 0.0
  %954 = vmatpush1.msra.mxu0 0.0
  %955 = vmatprep.subr.mxu0 0.0
  %956 = vmatpush1.msra.mxu0 0.0
  %957 = vmatprep.subr.mxu0 0.0
  %958 = vmatpush1.msra.mxu0 0.0
  %959 = vmatprep.subr.mxu0 0.0
  %960 = vmatpush1.msra.mxu0 0.0
  %961 = vmatprep.subr.mxu0 0.0
  %962 = vmatpush1.msra.mxu0 0.0
  %963 = vmatprep.subr.mxu0 0.0
  %964 = vmatpush1.msra.mxu0 0.0
  %965 = vmatprep.subr.mxu0 0.0
  %966 = vmatpush1.msra.mxu0 0.0
  %967 = vmatprep.subr.mxu0 0.0
  %968 = vmatpush1.msra.mxu0 0.0
  %969 = vmatprep.subr.mxu0 0.0
  %970 = vmatpush1.msra.mxu0 0.0
  %971 = vmatprep.subr.mxu0 0.0
  %972 = vmatpush1.msra.mxu0 0.0
  %973 = vmatprep.subr.mxu0 0.0
  %974 = vmatpush1.msra.mxu0 0.0
  %975 = vmatprep.subr.mxu0 0.0
  %976 = vmatpush1.msra.mxu0 0.0
  %977 = vmatprep.subr.mxu0 0.0
  %978 = vmatpush1.msra.mxu0 0.0
  %979 = vmatprep.subr.mxu0 0.0
  %980 = vmatpush1.msra.mxu0 0.0
  %981 = vmatprep.subr.mxu0 0.0
  %982 = vmatpush1.msra.mxu0 0.0
  %983 = vmatprep.subr.mxu0 0.0
  %984 = vmatpush1.msra.mxu0 0.0
  %985 = vmatprep.subr.mxu0 0.0
  %986 = vmatpush1.msra.mxu0 0.0
  %987 = vmatprep.subr.mxu0 0.0
  %988 = vmatpush1.msra.mxu0 0.0
  %989 = vmatprep.subr.mxu0 0.0
  %990 = vmatpush1.msra.mxu0 0.0
  %991 = vmatprep.subr.mxu0 0.0
  %992 = vmatpush1.msra.mxu0 0.0
  %993 = vmatprep.subr.mxu0 0.0
  %994 = vmatpush1.msra.mxu0 0.0
  %995 = vmatprep.subr.mxu0 0.0
  %996 = vmatpush1.msra.mxu0 0.0
  %997 = vmatprep.subr.mxu0 0.0
  %998 = vmatpush1.msra.mxu0 0.0
  %999 = vmatprep.subr.mxu0 0.0
  %1000 = vmatpush1.msra.mxu0 0.0
  %1001 = vmatprep.subr.mxu0 0.0
  %1002 = vmatpush1.msra.mxu0 0.0
  %1003 = vmatprep.subr.mxu0 0.0
  %1004 = vmatpush1.msra.mxu0 0.0
  %1005 = vmatprep.subr.mxu0 0.0
  %1006 = vmatpush1.msra.mxu0 0.0
  %1007 = vmatprep.subr.mxu0 0.0
  %1008 = vmatpush1.msra.mxu0 0.0
  %1009 = vmatprep.subr.mxu0 0.0
  %1010 = vmatpush1.msra.mxu0 0.0
  %1011 = vmatprep.subr.mxu0 0.0
  %1012 = vmatpush1.msra.mxu0 0.0
  %1013 = vmatprep.mubr.f32.mxu0 0.0
  %1014 = vmatmul.mubr.f32.gmra.mrb[0].mxu0 %v76
  %v1015 = vpop.f32.mrb[0].mxu0
  %v1016 = vadd.f32 %v67, %v1015
  %v1017 = vpop.f32.mrb[0].mxu0
  %v1018 = vadd.f32 %v67, %v1017
  %1019 = vmatprep.mubr.f32.mxu0 0.0
  %1020 = vmatmul.mubr.f32.gmra.mrb[0].mxu0 %v79
  %v1021 = vpop.f32.mrb[0].mxu0
  %v1022 = vadd.f32 %v72, %v1021
  %v1023 = vpop.f32.mrb[0].mxu0
  %v1024 = vadd.f32 %v72, %v1023
  %1025 = vdwg.mxu0
  %v1026 = vsel %vm61, %v926, 0.0
  %v1027 = vsel %vm61, %v928, 0.0
  %1030 = vrot.lane.b32.xlu0 %v1026, 96
  %v1031 = vpop.permute.xlu0 %1030
  %1032 = vrot.lane.b32.xlu0 %v1027, 96
  %v1033 = vpop.permute.xlu0 %1032
  %v1034 = vsel %vm59, %v1031, %v1033
  %v1037 = vadd.f32 %v1016, %v1034
  %v1038 = vadd.f32 %v1018, %v1033
  %v1039 = vxor.u32 %v1022, 2147483648
  %v1040 = vxor.u32 %v1024, 2147483648
  %v1041 = vmul.f32 %v1039, 1.442695
  %v1042 = vpow.pop %v1041
  %v1043 = vmul.f32 %v1040, 1.442695
  %v1044 = vpow.pop %v1043
  %v1045 = vadd.f32 %v1042, 1.0
  %v1046 = vadd.f32 %v1044, 1.0
  %v1047 = vrcp.pop %v1045
  %v1048 = vmul.f32 1.0, %v1047
  %v1049 = vrcp.pop %v1046
  %v1050 = vmul.f32 1.0, %v1049
  %v1051 = vmul.f32 %v1037, %v1048
  %v1052 = vmul.f32 %v1038, %v1050
  %1053 = vmatprep.subr.mxu0 %v1052
  %1054 = vmatpush1.msra.mxu0 %v1051
  %1055 = vmatprep.subr.mxu0 0.0
  %1056 = vmatpush1.msra.mxu0 0.0
  %1057 = vmatprep.subr.mxu0 0.0
  %1058 = vmatpush1.msra.mxu0 0.0
  %1059 = vmatprep.subr.mxu0 0.0
  %1060 = vmatpush1.msra.mxu0 0.0
  %1061 = vmatprep.subr.mxu0 0.0
  %1062 = vmatpush1.msra.mxu0 0.0
  %1063 = vmatprep.subr.mxu0 0.0
  %1064 = vmatpush1.msra.mxu0 0.0
  %1065 = vmatprep.subr.mxu0 0.0
  %1066 = vmatpush1.msra.mxu0 0.0
  %1067 = vmatprep.subr.mxu0 0.0
  %1068 = vmatpush1.msra.mxu0 0.0
  %1069 = vmatprep.subr.mxu0 0.0
  %1070 = vmatpush1.msra.mxu0 0.0
  %1071 = vmatprep.subr.mxu0 0.0
  %1072 = vmatpush1.msra.mxu0 0.0
  %1073 = vmatprep.subr.mxu0 0.0
  %1074 = vmatpush1.msra.mxu0 0.0
  %1075 = vmatprep.subr.mxu0 0.0
  %1076 = vmatpush1.msra.mxu0 0.0
  %1077 = vmatprep.subr.mxu0 0.0
  %1078 = vmatpush1.msra.mxu0 0.0
  %1079 = vmatprep.subr.mxu0 0.0
  %1080 = vmatpush1.msra.mxu0 0.0
  %1081 = vmatprep.subr.mxu0 0.0
  %1082 = vmatpush1.msra.mxu0 0.0
  %1083 = vmatprep.subr.mxu0 0.0
  %1084 = vmatpush1.msra.mxu0 0.0
  %1085 = vmatprep.subr.mxu0 0.0
  %1086 = vmatpush1.msra.mxu0 0.0
  %1087 = vmatprep.subr.mxu0 0.0
  %1088 = vmatpush1.msra.mxu0 0.0
  %1089 = vmatprep.subr.mxu0 0.0
  %1090 = vmatpush1.msra.mxu0 0.0
  %1091 = vmatprep.subr.mxu0 0.0
  %1092 = vmatpush1.msra.mxu0 0.0
  %1093 = vmatprep.subr.mxu0 0.0
  %1094 = vmatpush1.msra.mxu0 0.0
  %1095 = vmatprep.subr.mxu0 0.0
  %1096 = vmatpush1.msra.mxu0 0.0
  %1097 = vmatprep.subr.mxu0 0.0
  %1098 = vmatpush1.msra.mxu0 0.0
  %1099 = vmatprep.subr.mxu0 0.0
  %1100 = vmatpush1.msra.mxu0 0.0
  %1101 = vmatprep.subr.mxu0 0.0
  %1102 = vmatpush1.msra.mxu0 0.0
  %1103 = vmatprep.subr.mxu0 0.0
  %1104 = vmatpush1.msra.mxu0 0.0
  %1105 = vmatprep.subr.mxu0 0.0
  %1106 = vmatpush1.msra.mxu0 0.0
  %1107 = vmatprep.subr.mxu0 0.0
  %1108 = vmatpush1.msra.mxu0 0.0
  %1109 = vmatprep.subr.mxu0 0.0
  %1110 = vmatpush1.msra.mxu0 0.0
  %1111 = vmatprep.subr.mxu0 0.0
  %1112 = vmatpush1.msra.mxu0 0.0
  %1113 = vmatprep.subr.mxu0 0.0
  %1114 = vmatpush1.msra.mxu0 0.0
  %1115 = vmatprep.subr.mxu0 0.0
  %1116 = vmatpush1.msra.mxu0 0.0
  %1117 = vmatprep.mubr.f32.mxu0 0.0
  %1118 = vmatmul.mubr.f32.gmra.mrb[0].mxu0 %v192
  %v1119 = vpop.f32.mrb[0].mxu0
  %v1120 = vadd.f32 0.0, %v1119
  %v1121 = vpop.f32.mrb[0].mxu0
  %v1122 = vadd.f32 0.0, %v1121
  %1123 = vdwg.mxu0
  %1124 = vmatprep.subr.mxu0 %v1052
  %1125 = vmatpush1.msra.mxu0 %v1051
  %1126 = vmatprep.subr.mxu0 0.0
  %1127 = vmatpush1.msra.mxu0 0.0
  %1128 = vmatprep.subr.mxu0 0.0
  %1129 = vmatpush1.msra.mxu0 0.0
  %1130 = vmatprep.subr.mxu0 0.0
  %1131 = vmatpush1.msra.mxu0 0.0
  %1132 = vmatprep.subr.mxu0 0.0
  %1133 = vmatpush1.msra.mxu0 0.0
  %1134 = vmatprep.subr.mxu0 0.0
  %1135 = vmatpush1.msra.mxu0 0.0
  %1136 = vmatprep.subr.mxu0 0.0
  %1137 = vmatpush1.msra.mxu0 0.0
  %1138 = vmatprep.subr.mxu0 0.0
  %1139 = vmatpush1.msra.mxu0 0.0
  %1140 = vmatprep.subr.mxu0 0.0
  %1141 = vmatpush1.msra.mxu0 0.0
  %1142 = vmatprep.subr.mxu0 0.0
  %1143 = vmatpush1.msra.mxu0 0.0
  %1144 = vmatprep.subr.mxu0 0.0
  %1145 = vmatpush1.msra.mxu0 0.0
  %1146 = vmatprep.subr.mxu0 0.0
  %1147 = vmatpush1.msra.mxu0 0.0
  %1148 = vmatprep.subr.mxu0 0.0
  %1149 = vmatpush1.msra.mxu0 0.0
  %1150 = vmatprep.subr.mxu0 0.0
  %1151 = vmatpush1.msra.mxu0 0.0
  %1152 = vmatprep.subr.mxu0 0.0
  %1153 = vmatpush1.msra.mxu0 0.0
  %1154 = vmatprep.subr.mxu0 0.0
  %1155 = vmatpush1.msra.mxu0 0.0
  %1156 = vmatprep.subr.mxu0 0.0
  %1157 = vmatpush1.msra.mxu0 0.0
  %1158 = vmatprep.subr.mxu0 0.0
  %1159 = vmatpush1.msra.mxu0 0.0
  %1160 = vmatprep.subr.mxu0 0.0
  %1161 = vmatpush1.msra.mxu0 0.0
  %1162 = vmatprep.subr.mxu0 0.0
  %1163 = vmatpush1.msra.mxu0 0.0
  %1164 = vmatprep.subr.mxu0 0.0
  %1165 = vmatpush1.msra.mxu0 0.0
  %1166 = vmatprep.subr.mxu0 0.0
  %1167 = vmatpush1.msra.mxu0 0.0
  %1168 = vmatprep.subr.mxu0 0.0
  %1169 = vmatpush1.msra.mxu0 0.0
  %1170 = vmatprep.subr.mxu0 0.0
  %1171 = vmatpush1.msra.mxu0 0.0
  %1172 = vmatprep.subr.mxu0 0.0
  %1173 = vmatpush1.msra.mxu0 0.0
  %1174 = vmatprep.subr.mxu0 0.0
  %1175 = vmatpush1.msra.mxu0 0.0
  %1176 = vmatprep.subr.mxu0 0.0
  %1177 = vmatpush1.msra.mxu0 0.0
  %1178 = vmatprep.subr.mxu0 0.0
  %1179 = vmatpush1.msra.mxu0 0.0
  %1180 = vmatprep.subr.mxu0 0.0
  %1181 = vmatpush1.msra.mxu0 0.0
  %1182 = vmatprep.subr.mxu0 0.0
  %1183 = vmatpush1.msra.mxu0 0.0
  %1184 = vmatprep.subr.mxu0 0.0
  %1185 = vmatpush1.msra.mxu0 0.0
  %1186 = vmatprep.subr.mxu0 0.0
  %1187 = vmatpush1.msra.mxu0 0.0
  %1188 = vmatprep.mubr.f32.mxu0 0.0
  %1189 = vmatmul.mubr.f32.gmra.mrb[0].mxu0 %v324
  %v1190 = vpop.f32.mrb[0].mxu0
  %v1191 = vadd.f32 0.0, %v1190
  %v1192 = vpop.f32.mrb[0].mxu0
  %v1193 = vadd.f32 0.0, %v1192
  %1194 = vdwg.mxu0
  %v1196 = vsel %vm59, %v1193, 0
  %1198 = vmatprep.subr.mxu0 %v399
  %1199 = vmatpush1.msra.mxu0 %v398
  %1200 = vmatprep.subr.mxu0 %v401
  %1201 = vmatpush1.msra.mxu0 %v400
  %1202 = vmatprep.subr.mxu0 %v403
  %1203 = vmatpush1.msra.mxu0 %v402
  %1204 = vmatprep.subr.mxu0 %v405
  %1205 = vmatpush1.msra.mxu0 %v404
  %1206 = vmatprep.subr.mxu0 %v407
  %1207 = vmatpush1.msra.mxu0 %v406
  %1208 = vmatprep.subr.mxu0 %v409
  %1209 = vmatpush1.msra.mxu0 %v408
  %1210 = vmatprep.subr.mxu0 %v411
  %1211 = vmatpush1.msra.mxu0 %v410
  %1212 = vmatprep.subr.mxu0 %v413
  %1213 = vmatpush1.msra.mxu0 %v412
  %1214 = vmatprep.subr.mxu0 %v415
  %1215 = vmatpush1.msra.mxu0 %v414
  %1216 = vmatprep.subr.mxu0 %v417
  %1217 = vmatpush1.msra.mxu0 %v416
  %1218 = vmatprep.subr.mxu0 %v419
  %1219 = vmatpush1.msra.mxu0 %v418
  %1220 = vmatprep.subr.mxu0 %v421
  %1221 = vmatpush1.msra.mxu0 %v420
  %1222 = vmatprep.subr.mxu0 %v423
  %1223 = vmatpush1.msra.mxu0 %v422
  %1224 = vmatprep.subr.mxu0 %v425
  %1225 = vmatpush1.msra.mxu0 %v424
  %1226 = vmatprep.subr.mxu0 %v427
  %1227 = vmatpush1.msra.mxu0 %v426
  %1228 = vmatprep.subr.mxu0 %v429
  %1229 = vmatpush1.msra.mxu0 %v428
  %1230 = vmatprep.subr.mxu0 %v431
  %1231 = vmatpush1.msra.mxu0 %v430
  %1232 = vmatprep.subr.mxu0 %v433
  %1233 = vmatpush1.msra.mxu0 %v432
  %1234 = vmatprep.subr.mxu0 %v435
  %1235 = vmatpush1.msra.mxu0 %v434
  %1236 = vmatprep.subr.mxu0 %v437
  %1237 = vmatpush1.msra.mxu0 %v436
  %1238 = vmatprep.subr.mxu0 %v439
  %1239 = vmatpush1.msra.mxu0 %v438
  %1240 = vmatprep.subr.mxu0 %v441
  %1241 = vmatpush1.msra.mxu0 %v440
  %1242 = vmatprep.subr.mxu0 %v443
  %1243 = vmatpush1.msra.mxu0 %v442
  %1244 = vmatprep.subr.mxu0 %v445
  %1245 = vmatpush1.msra.mxu0 %v444
  %1246 = vmatprep.subr.mxu0 %v447
  %1247 = vmatpush1.msra.mxu0 %v446
  %1248 = vmatprep.subr.mxu0 %v449
  %1249 = vmatpush1.msra.mxu0 %v448
  %1250 = vmatprep.subr.mxu0 %v451
  %1251 = vmatpush1.msra.mxu0 %v450
  %1252 = vmatprep.subr.mxu0 %v453
  %1253 = vmatpush1.msra.mxu0 %v452
  %1254 = vmatprep.subr.mxu0 0.0
  %1255 = vmatpush1.msra.mxu0 0.0
  %1256 = vmatprep.subr.mxu0 0.0
  %1257 = vmatpush1.msra.mxu0 0.0
  %1258 = vmatprep.subr.mxu0 0.0
  %1259 = vmatpush1.msra.mxu0 0.0
  %1260 = vmatprep.subr.mxu0 0.0
  %1261 = vmatpush1.msra.mxu0 0.0
  %1262 = vmatprep.mubr.f32.mxu0 %v1196
  %1263 = vmatmul.mubr.f32.gmra.mrb[0].mxu0 %v1191
  %v1264 = vpop.f32.mrb[0].mxu0
  %v1265 = vadd.f32 0.0, %v1264
  %v1266 = vpop.f32.mrb[0].mxu0
  %v1267 = vadd.f32 0.0, %v1266
  %1268 = vdwg.mxu0
  %v1270 = vsel %vm59, %v1122, 0
  %1272 = vmatprep.subr.mxu0 %v266
  %1273 = vmatpush1.msra.mxu0 %v265
  %1274 = vmatprep.subr.mxu0 %v268
  %1275 = vmatpush1.msra.mxu0 %v267
  %1276 = vmatprep.subr.mxu0 %v270
  %1277 = vmatpush1.msra.mxu0 %v269
  %1278 = vmatprep.subr.mxu0 %v272
  %1279 = vmatpush1.msra.mxu0 %v271
  %1280 = vmatprep.subr.mxu0 %v274
  %1281 = vmatpush1.msra.mxu0 %v273
  %1282 = vmatprep.subr.mxu0 %v276
  %1283 = vmatpush1.msra.mxu0 %v275
  %1284 = vmatprep.subr.mxu0 %v278
  %1285 = vmatpush1.msra.mxu0 %v277
  %1286 = vmatprep.subr.mxu0 %v280
  %1287 = vmatpush1.msra.mxu0 %v279
  %1288 = vmatprep.subr.mxu0 %v282
  %1289 = vmatpush1.msra.mxu0 %v281
  %1290 = vmatprep.subr.mxu0 %v284
  %1291 = vmatpush1.msra.mxu0 %v283
  %1292 = vmatprep.subr.mxu0 %v286
  %1293 = vmatpush1.msra.mxu0 %v285
  %1294 = vmatprep.subr.mxu0 %v288
  %1295 = vmatpush1.msra.mxu0 %v287
  %1296 = vmatprep.subr.mxu0 %v290
  %1297 = vmatpush1.msra.mxu0 %v289
  %1298 = vmatprep.subr.mxu0 %v292
  %1299 = vmatpush1.msra.mxu0 %v291
  %1300 = vmatprep.subr.mxu0 %v294
  %1301 = vmatpush1.msra.mxu0 %v293
  %1302 = vmatprep.subr.mxu0 %v296
  %1303 = vmatpush1.msra.mxu0 %v295
  %1304 = vmatprep.subr.mxu0 %v298
  %1305 = vmatpush1.msra.mxu0 %v297
  %1306 = vmatprep.subr.mxu0 %v300
  %1307 = vmatpush1.msra.mxu0 %v299
  %1308 = vmatprep.subr.mxu0 %v302
  %1309 = vmatpush1.msra.mxu0 %v301
  %1310 = vmatprep.subr.mxu0 %v304
  %1311 = vmatpush1.msra.mxu0 %v303
  %1312 = vmatprep.subr.mxu0 %v306
  %1313 = vmatpush1.msra.mxu0 %v305
  %1314 = vmatprep.subr.mxu0 %v308
  %1315 = vmatpush1.msra.mxu0 %v307
  %1316 = vmatprep.subr.mxu0 %v310
  %1317 = vmatpush1.msra.mxu0 %v309
  %1318 = vmatprep.subr.mxu0 %v312
  %1319 = vmatpush1.msra.mxu0 %v311
  %1320 = vmatprep.subr.mxu0 %v314
  %1321 = vmatpush1.msra.mxu0 %v313
  %1322 = vmatprep.subr.mxu0 %v316
  %1323 = vmatpush1.msra.mxu0 %v315
  %1324 = vmatprep.subr.mxu0 %v318
  %1325 = vmatpush1.msra.mxu0 %v317
  %1326 = vmatprep.subr.mxu0 %v320
  %1327 = vmatpush1.msra.mxu0 %v319
  %1328 = vmatprep.subr.mxu0 0.0
  %1329 = vmatpush1.msra.mxu0 0.0
  %1330 = vmatprep.subr.mxu0 0.0
  %1331 = vmatpush1.msra.mxu0 0.0
  %1332 = vmatprep.subr.mxu0 0.0
  %1333 = vmatpush1.msra.mxu0 0.0
  %1334 = vmatprep.subr.mxu0 0.0
  %1335 = vmatpush1.msra.mxu0 0.0
  %1336 = vmatprep.mubr.f32.mxu0 %v1270
  %1337 = vmatmul.mubr.f32.gmra.mrb[0].mxu0 %v1120
  %v1338 = vpop.f32.mrb[0].mxu0
  %v1339 = vadd.f32 %v1265, %v1338
  %v1340 = vpop.f32.mrb[0].mxu0
  %v1341 = vadd.f32 %v1267, %v1340
  %1342 = vdwg.mxu0
  %1343 = vmatprep.subr.mxu0 %v1052
  %1344 = vmatpush1.msra.mxu0 %v1051
  %1345 = vmatprep.subr.mxu0 0.0
  %1346 = vmatpush1.msra.mxu0 0.0
  %1347 = vmatprep.subr.mxu0 0.0
  %1348 = vmatpush1.msra.mxu0 0.0
  %1349 = vmatprep.subr.mxu0 0.0
  %1350 = vmatpush1.msra.mxu0 0.0
  %1351 = vmatprep.subr.mxu0 0.0
  %1352 = vmatpush1.msra.mxu0 0.0
  %1353 = vmatprep.subr.mxu0 0.0
  %1354 = vmatpush1.msra.mxu0 0.0
  %1355 = vmatprep.subr.mxu0 0.0
  %1356 = vmatpush1.msra.mxu0 0.0
  %1357 = vmatprep.subr.mxu0 0.0
  %1358 = vmatpush1.msra.mxu0 0.0
  %1359 = vmatprep.subr.mxu0 0.0
  %1360 = vmatpush1.msra.mxu0 0.0
  %1361 = vmatprep.subr.mxu0 0.0
  %1362 = vmatpush1.msra.mxu0 0.0
  %1363 = vmatprep.subr.mxu0 0.0
  %1364 = vmatpush1.msra.mxu0 0.0
  %1365 = vmatprep.subr.mxu0 0.0
  %1366 = vmatpush1.msra.mxu0 0.0
  %1367 = vmatprep.subr.mxu0 0.0
  %1368 = vmatpush1.msra.mxu0 0.0
  %1369 = vmatprep.subr.mxu0 0.0
  %1370 = vmatpush1.msra.mxu0 0.0
  %1371 = vmatprep.subr.mxu0 0.0
  %1372 = vmatpush1.msra.mxu0 0.0
  %1373 = vmatprep.subr.mxu0 0.0
  %1374 = vmatpush1.msra.mxu0 0.0
  %1375 = vmatprep.subr.mxu0 0.0
  %1376 = vmatpush1.msra.mxu0 0.0
  %1377 = vmatprep.subr.mxu0 0.0
  %1378 = vmatpush1.msra.mxu0 0.0
  %1379 = vmatprep.subr.mxu0 0.0
  %1380 = vmatpush1.msra.mxu0 0.0
  %1381 = vmatprep.subr.mxu0 0.0
  %1382 = vmatpush1.msra.mxu0 0.0
  %1383 = vmatprep.subr.mxu0 0.0
  %1384 = vmatpush1.msra.mxu0 0.0
  %1385 = vmatprep.subr.mxu0 0.0
  %1386 = vmatpush1.msra.mxu0 0.0
  %1387 = vmatprep.subr.mxu0 0.0
  %1388 = vmatpush1.msra.mxu0 0.0
  %1389 = vmatprep.subr.mxu0 0.0
  %1390 = vmatpush1.msra.mxu0 0.0
  %1391 = vmatprep.subr.mxu0 0.0
  %1392 = vmatpush1.msra.mxu0 0.0
  %1393 = vmatprep.subr.mxu0 0.0
  %1394 = vmatpush1.msra.mxu0 0.0
  %1395 = vmatprep.subr.mxu0 0.0
  %1396 = vmatpush1.msra.mxu0 0.0
  %1397 = vmatprep.subr.mxu0 0.0
  %1398 = vmatpush1.msra.mxu0 0.0
  %1399 = vmatprep.subr.mxu0 0.0
  %1400 = vmatpush1.msra.mxu0 0.0
  %1401 = vmatprep.subr.mxu0 0.0
  %1402 = vmatpush1.msra.mxu0 0.0
  %1403 = vmatprep.subr.mxu0 0.0
  %1404 = vmatpush1.msra.mxu0 0.0
  %1405 = vmatprep.subr.mxu0 0.0
  %1406 = vmatpush1.msra.mxu0 0.0
  %1407 = vmatprep.mubr.f32.mxu0 0.0
  %1408 = vmatmul.mubr.f32.gmra.mrb[0].mxu0 %v605
  %v1409 = vpop.f32.mrb[0].mxu0
  %v1410 = vadd.f32 0.0, %v1409
  %v1411 = vpop.f32.mrb[0].mxu0
  %v1412 = vadd.f32 0.0, %v1411
  %1413 = vdwg.mxu0
  %v1415 = vsel %vm59, %v1412, 0
  %1417 = vmatprep.subr.mxu0 %v680
  %1418 = vmatpush1.msra.mxu0 %v679
  %1419 = vmatprep.subr.mxu0 %v682
  %1420 = vmatpush1.msra.mxu0 %v681
  %1421 = vmatprep.subr.mxu0 %v684
  %1422 = vmatpush1.msra.mxu0 %v683
  %1423 = vmatprep.subr.mxu0 %v686
  %1424 = vmatpush1.msra.mxu0 %v685
  %1425 = vmatprep.subr.mxu0 %v688
  %1426 = vmatpush1.msra.mxu0 %v687
  %1427 = vmatprep.subr.mxu0 %v690
  %1428 = vmatpush1.msra.mxu0 %v689
  %1429 = vmatprep.subr.mxu0 %v692
  %1430 = vmatpush1.msra.mxu0 %v691
  %1431 = vmatprep.subr.mxu0 %v694
  %1432 = vmatpush1.msra.mxu0 %v693
  %1433 = vmatprep.subr.mxu0 %v696
  %1434 = vmatpush1.msra.mxu0 %v695
  %1435 = vmatprep.subr.mxu0 %v698
  %1436 = vmatpush1.msra.mxu0 %v697
  %1437 = vmatprep.subr.mxu0 %v700
  %1438 = vmatpush1.msra.mxu0 %v699
  %1439 = vmatprep.subr.mxu0 %v702
  %1440 = vmatpush1.msra.mxu0 %v701
  %1441 = vmatprep.subr.mxu0 %v704
  %1442 = vmatpush1.msra.mxu0 %v703
  %1443 = vmatprep.subr.mxu0 %v706
  %1444 = vmatpush1.msra.mxu0 %v705
  %1445 = vmatprep.subr.mxu0 %v708
  %1446 = vmatpush1.msra.mxu0 %v707
  %1447 = vmatprep.subr.mxu0 %v710
  %1448 = vmatpush1.msra.mxu0 %v709
  %1449 = vmatprep.subr.mxu0 %v712
  %1450 = vmatpush1.msra.mxu0 %v711
  %1451 = vmatprep.subr.mxu0 %v714
  %1452 = vmatpush1.msra.mxu0 %v713
  %1453 = vmatprep.subr.mxu0 %v716
  %1454 = vmatpush1.msra.mxu0 %v715
  %1455 = vmatprep.subr.mxu0 %v718
  %1456 = vmatpush1.msra.mxu0 %v717
  %1457 = vmatprep.subr.mxu0 %v720
  %1458 = vmatpush1.msra.mxu0 %v719
  %1459 = vmatprep.subr.mxu0 %v722
  %1460 = vmatpush1.msra.mxu0 %v721
  %1461 = vmatprep.subr.mxu0 %v724
  %1462 = vmatpush1.msra.mxu0 %v723
  %1463 = vmatprep.subr.mxu0 %v726
  %1464 = vmatpush1.msra.mxu0 %v725
  %1465 = vmatprep.subr.mxu0 %v728
  %1466 = vmatpush1.msra.mxu0 %v727
  %1467 = vmatprep.subr.mxu0 %v730
  %1468 = vmatpush1.msra.mxu0 %v729
  %1469 = vmatprep.subr.mxu0 %v732
  %1470 = vmatpush1.msra.mxu0 %v731
  %1471 = vmatprep.subr.mxu0 %v734
  %1472 = vmatpush1.msra.mxu0 %v733
  %1473 = vmatprep.subr.mxu0 0.0
  %1474 = vmatpush1.msra.mxu0 0.0
  %1475 = vmatprep.subr.mxu0 0.0
  %1476 = vmatpush1.msra.mxu0 0.0
  %1477 = vmatprep.subr.mxu0 0.0
  %1478 = vmatpush1.msra.mxu0 0.0
  %1479 = vmatprep.subr.mxu0 0.0
  %1480 = vmatpush1.msra.mxu0 0.0
  %1481 = vmatprep.mubr.f32.mxu0 %v1415
  %1482 = vmatmul.mubr.f32.gmra.mrb[0].mxu0 %v1410
  %v1483 = vpop.f32.mrb[0].mxu0
  %v1484 = vadd.f32 0.0, %v1483
  %v1485 = vpop.f32.mrb[0].mxu0
  %v1486 = vadd.f32 0.0, %v1485
  %1487 = vdwg.mxu0
  %v1488 = vadd.f32 %v1339, %v1484
  %v1489 = vadd.f32 %v1341, %v1486
  %v1490 = vadd.f32 %v1488, %v815
  %v1491 = vadd.f32 %v1489, %v815
  %v1492 = vadd.f32 %v1490, %v1051
  %v1493 = vadd.f32 %v1491, %v1052
  %v1494 = vmax.f32 %v1492, 0.0
  %v1495 = vmax.f32 %v1493, 0.0
  %1498 = vrot.lane.b32.xlu0 %v1494, 112
  %v1499 = vpop.permute.xlu0 %1498
  %1500 = vrot.lane.b32.xlu0 %v1495, 112
  %v1501 = vpop.permute.xlu0 %1500
  %v1502 = vsel %vm51, %v1499, %v1501
  %1505 = vrot.lane.b32.xlu0 %v1494, 96
  %v1506 = vpop.permute.xlu0 %1505
  %1507 = vrot.lane.b32.xlu0 %v1495, 96
  %v1508 = vpop.permute.xlu0 %1507
  %v1509 = vsel %vm59, %v1506, %v1508
  %1512 = vmatprep.subr.mxu0 %v1495
  %1513 = vmatpush1.msra.mxu0 %v1494
  %1514 = vmatprep.subr.mxu0 %v1501
  %1515 = vmatpush1.msra.mxu0 %v1502
  %1516 = vmatprep.subr.mxu0 %v1508
  %1517 = vmatpush1.msra.mxu0 %v1509
  %1518 = vmatprep.subr.mxu0 0.0
  %1519 = vmatpush1.msra.mxu0 0.0
  %1520 = vmatprep.subr.mxu0 0.0
  %1521 = vmatpush1.msra.mxu0 0.0
  %1522 = vmatprep.subr.mxu0 0.0
  %1523 = vmatpush1.msra.mxu0 0.0
  %1524 = vmatprep.subr.mxu0 0.0
  %1525 = vmatpush1.msra.mxu0 0.0
  %1526 = vmatprep.subr.mxu0 0.0
  %1527 = vmatpush1.msra.mxu0 0.0
  %1528 = vmatprep.subr.mxu0 0.0
  %1529 = vmatpush1.msra.mxu0 0.0
  %1530 = vmatprep.subr.mxu0 0.0
  %1531 = vmatpush1.msra.mxu0 0.0
  %1532 = vmatprep.subr.mxu0 0.0
  %1533 = vmatpush1.msra.mxu0 0.0
  %1534 = vmatprep.subr.mxu0 0.0
  %1535 = vmatpush1.msra.mxu0 0.0
  %1536 = vmatprep.subr.mxu0 0.0
  %1537 = vmatpush1.msra.mxu0 0.0
  %1538 = vmatprep.subr.mxu0 0.0
  %1539 = vmatpush1.msra.mxu0 0.0
  %1540 = vmatprep.subr.mxu0 0.0
  %1541 = vmatpush1.msra.mxu0 0.0
  %1542 = vmatprep.subr.mxu0 0.0
  %1543 = vmatpush1.msra.mxu0 0.0
  %1544 = vmatprep.subr.mxu0 0.0
  %1545 = vmatpush1.msra.mxu0 0.0
  %1546 = vmatprep.subr.mxu0 0.0
  %1547 = vmatpush1.msra.mxu0 0.0
  %1548 = vmatprep.subr.mxu0 0.0
  %1549 = vmatpush1.msra.mxu0 0.0
  %1550 = vmatprep.subr.mxu0 0.0
  %1551 = vmatpush1.msra.mxu0 0.0
  %1552 = vmatprep.subr.mxu0 0.0
  %1553 = vmatpush1.msra.mxu0 0.0
  %1554 = vmatprep.subr.mxu0 0.0
  %1555 = vmatpush1.msra.mxu0 0.0
  %1556 = vmatprep.subr.mxu0 0.0
  %1557 = vmatpush1.msra.mxu0 0.0
  %1558 = vmatprep.subr.mxu0 0.0
  %1559 = vmatpush1.msra.mxu0 0.0
  %1560 = vmatprep.subr.mxu0 0.0
  %1561 = vmatpush1.msra.mxu0 0.0
  %1562 = vmatprep.subr.mxu0 0.0
  %1563 = vmatpush1.msra.mxu0 0.0
  %1564 = vmatprep.subr.mxu0 0.0
  %1565 = vmatpush1.msra.mxu0 0.0
  %1566 = vmatprep.subr.mxu0 0.0
  %1567 = vmatpush1.msra.mxu0 0.0
  %1568 = vmatprep.subr.mxu0 0.0
  %1569 = vmatpush1.msra.mxu0 0.0
  %1570 = vmatprep.subr.mxu0 0.0
  %1571 = vmatpush1.msra.mxu0 0.0
  %1572 = vmatprep.subr.mxu0 0.0
  %1573 = vmatpush1.msra.mxu0 0.0
  %1574 = vmatprep.subr.mxu0 0.0
  %1575 = vmatpush1.msra.mxu0 0.0
  %1576 = vmatprep.mubr.f32.mxu0 0.0
  %1577 = vmatmul.mubr.f32.gmra.mrb[0].mxu0 %v848
  %v1578 = vpop.f32.mrb[0].mxu0
  %v1579 = vadd.f32 %v844, %v1578
  %v1580 = vpop.f32.mrb[0].mxu0
  %v1581 = vadd.f32 %v844, %v1580
  %1582 = vdwg.mxu0
  %v1583 = vadd.f32 %v1579, %v1509
  %v1584 = vadd.f32 %v1581, %v1508
  %v1585 = vmax.f32 %v1583, 0.0
  %v1586 = vmax.f32 %v1584, 0.0
  %1589 = vrot.lane.b32.xlu0 %v1585, 64
  %v1590 = vpop.permute.xlu0 %1589
  %1591 = vrot.lane.b32.xlu0 %v1586, 64
  %v1592 = vpop.permute.xlu0 %1591
  %vm1593 = vcmask 523264
  %v1594 = vsel %vm1593, %v1590, %v1592
  %v1597 = vsel %vm1593, %v924, %v1590
  %v1598 = vadd.f32 %v923, %v1597
  %v1599 = vadd.f32 %v1598, %v1594
  %1600 = vadd.xlane.f32.xlu0 %v1599
  %v1601 = vpop.xlane.xlu0 %1600
  %v1602 = vrcp.pop 384.0
  %v1603 = vmul.f32 %v1601, %v1602
  %v1604 = vmul.f32 %v923, %v923
  %v1605 = vmul.f32 %v1597, %v1597
  %v1606 = vmul.f32 %v1594, %v1594
  %v1607 = vadd.f32 %v1604, %v1605
  %v1608 = vadd.f32 %v1607, %v1606
  %1609 = vadd.xlane.f32.xlu0 %v1608
  %v1610 = vpop.xlane.xlu0 %1609
  %v1611 = vmul.f32 %v1610, %v1602
  %v1612 = vmul.f32 %v1603, %v1603
  %v1613 = vsub.f32 %v1611, %v1612
  %v1614 = vsub.f32 %v923, %v1603
  %v1615 = vsub.f32 %v1597, %v1603
  %v1616 = vsub.f32 %v1594, %v1603
  %v1617 = vadd.f32 %v1613, 1e-05
  %v1618 = vrsqrt.pop %v1617
  %v1619 = vmul.f32 %v1614, %v1618
  %v1620 = vmul.f32 %v1615, %v1618
  %v1621 = vmul.f32 %v1616, %v1618
  %v1622 = vld [vmem:[%s8] sm:$0xff]
  %1624 = vset.pattern.permute.xlu0 0
  %1625 = vperm.xlu0 %1624, %v1622
  %v1626 = vpop.permute.xlu0 %1625
  %v1628 = vmul.f32 %v1619, %v1626
  %v1629 = vmul.f32 %v1620, %v1626
  %v1630 = vmul.f32 %v1621, %v1626
  %v1631 = vld [vmem:[%s9] sm:$0xff]
  %1633 = vset.pattern.permute.xlu0 0
  %1634 = vperm.xlu0 %1633, %v1631
  %v1635 = vpop.permute.xlu0 %1634
  %v1637 = vadd.f32 %v1628, %v1635
  %v1638 = vadd.f32 %v1629, %v1635
  %v1639 = vadd.f32 %v1630, %v1635
  %v1640 = vld [vmem:[%s10] sm:$0xff]
  %v1641 = vld [vmem:[%s10 + $0x8] sm:$0xff]
  %v1642 = vld [vmem:[%s10 + $0x10] sm:$0xff]
  %vm1643 = vcmp.ge.f32.partialorder %v1640, 0.1
  %vm1644 = vcmp.ge.f32.partialorder %v1641, 0.1
  %vm1645 = vcmp.ge.f32.partialorder %v1642, 0.1
  %v1646 = vmul.f32 %v1637, 1.1111112
  %v1647 = vmul.f32 %v1638, 1.1111112
  %v1648 = vmul.f32 %v1639, 1.1111112
  %v1649 = vsel %vm1643, %v1646, 0.0
  %v1650 = vsel %vm1644, %v1647, 0.0
  %v1651 = vsel %vm1645, %v1648, 0.0
  %1652 = vst [vmem:[%s11] sm:$0xff] %v1649
  %1653 = vst.msk [vmem:[%s11 + $0x8] sm:$0xff] %vm1593, %v1650
  %1656 = vrot.lane.b32.xlu0 %v1650, 64
  %v1657 = vpop.permute.xlu0 %1656
  %1658 = vrot.lane.b32.xlu0 %v1651, 64
  %v1659 = vpop.permute.xlu0 %1658
  %v1660 = vsel %vm1593, %v1657, %v1659
  %s1663 = scalar_lea.vmem %s11, 16
  %1664 = vst [vmem:[%s1663] sm:$0xff] %v1660
  %1665 = vst.msk [vmem:[%s1663 + $0x8] sm:$0xff] %vm1593, %v1659
  // Predicated region
  $region46: #{st_conv_block.1} parent=0 // pred_check
    _
  $region47: #{st_conv_block.1} parent=0 // pred_check_branch
    %1667 = sbr.rel (0) target = $region49
  $region48: #{st_conv_block.1} parent=0 // pred_region
    _
  $region49: #{st_conv_block.1} parent=0 // pred_fallthru
    _
  // Predicated region
  $region50: #{st_conv_block.1} parent=0 // pred_check
    _
  $region51: #{st_conv_block.1} parent=0 // pred_check_branch
    %1669 = sbr.rel (0) target = $region53
  $region52: #{st_conv_block.1} parent=0 // pred_region
    _
  $region53: #{st_conv_block.1} parent=0 // pred_fallthru
    _

</llo_original>
